<compile_context>
chip_gen: v7x
topology: tpu7x:2x2x1
jax: 0.10.0
libtpu: 0.0.40
codegen_flags: <defaults>
</compile_context>

<pallas_src>
import jax
import jax.numpy as jnp
import numpy as np
from jax import lax
from jax.experimental import pallas as pl
from jax.experimental.pallas import tpu as pltpu


def _round_up(x, m):
    return (x + m - 1) // m * m


# ---------------------------------------------------------------------------
# Pallas kernels
# ---------------------------------------------------------------------------

def _conv_pool_kernel(p_ref, w_ref, b_ref, o_ref):
    """Fused conv + bias + ReLU + 2x2 max-pool (as 4 pool-phase GEMMs).

    p_ref: (4, K, TM) pool-phase im2col patches (lane dim = pooled spatial M)
    w_ref: (Cout, K)  reshaped conv weight
    b_ref: (Cout, 1)  bias
    o_ref: (Cout, TM) = relu(max_d(w @ p[d]) + b)   -- lane-dense output
    """
    w = w_ref[...]
    y = jnp.dot(w, p_ref[0], preferred_element_type=jnp.float32)
    for d in range(1, 4):
        y = jnp.maximum(y, jnp.dot(w, p_ref[d],
                                   preferred_element_type=jnp.float32))
    o_ref[...] = jnp.maximum(y + b_ref[...], 0.0)


def _fc_kernel(x_ref, w1_ref, b1_ref, w2_ref, b2_ref, w3_ref, b3_ref, o_ref):
    """Fused fc1+ReLU -> fc2+ReLU -> fc3, all weights resident in VMEM."""
    h = jnp.dot(x_ref[...], w1_ref[...], preferred_element_type=jnp.float32)
    h = jnp.maximum(h + b1_ref[...], 0.0)
    h = jnp.dot(h, w2_ref[...], preferred_element_type=jnp.float32)
    h = jnp.maximum(h + b2_ref[...], 0.0)
    o_ref[...] = (jnp.dot(h, w3_ref[...], preferred_element_type=jnp.float32)
                  + b3_ref[...])


# ---------------------------------------------------------------------------
# Pallas call wrappers
# ---------------------------------------------------------------------------

def conv_relu_pool_pallas(p4, w2, b2):
    """p4: (4, K, Mp) f32 pool-phase patches; w2: (Cout, K); b2: (Cout, 1).

    Returns (Cout, Mp) = relu(maxpool2x2(conv) + b), lane-dense in Mp.
    """
    _, K, Mp = p4.shape
    Cout = w2.shape[0]

    if Mp <= 512:                       # single block (block == full array dim)
        TM, Mp_pad = Mp, Mp
    else:                               # tile M; parallel grid axis
        TM = 512
        Mp_pad = _round_up(Mp, TM)
        p4 = jnp.pad(p4, ((0, 0), (0, 0), (0, Mp_pad - Mp)))

    out = pl.pallas_call(
        _conv_pool_kernel,
        out_shape=jax.ShapeDtypeStruct((Cout, Mp_pad), jnp.float32),
        grid=(Mp_pad // TM,),
        in_specs=[
            pl.BlockSpec((4, K, TM), lambda m: (0, 0, m)),
            pl.BlockSpec((Cout, K), lambda m: (0, 0)),
            pl.BlockSpec((Cout, 1), lambda m: (0, 0)),
        ],
        out_specs=pl.BlockSpec((Cout, TM), lambda m: (0, m)),
        compiler_params=pltpu.CompilerParams(
            dimension_semantics=("parallel",)),
        cost_estimate=pl.CostEstimate(
            flops=2 * 4 * Cout * K * Mp_pad,
            transcendentals=0,
            bytes_accessed=4 * (4 * K * Mp_pad + Cout * K + Cout
                                + Cout * Mp_pad)),
    )(p4, w2, b2)
    return out[:, :Mp] if Mp_pad != Mp else out


def fc_block_pallas(x, w1, b1, w2, b2, w3, b3):
    """x: (B, 400). Returns (B, 10) = fc3(relu(fc2(relu(fc1(x)))))."""
    B, K = x.shape
    H1, H2, N = w1.shape[1], w2.shape[1], w3.shape[1]

    if B <= 256:
        TB, B_pad = B, B
    else:
        TB = 256
        B_pad = _round_up(B, TB)
        x = jnp.pad(x, ((0, B_pad - B), (0, 0)))

    out = pl.pallas_call(
        _fc_kernel,
        out_shape=jax.ShapeDtypeStruct((B_pad, N), jnp.float32),
        grid=(B_pad // TB,),
        in_specs=[
            pl.BlockSpec((TB, K), lambda m: (m, 0)),
            pl.BlockSpec((K, H1), lambda m: (0, 0)),
            pl.BlockSpec((1, H1), lambda m: (0, 0)),
            pl.BlockSpec((H1, H2), lambda m: (0, 0)),
            pl.BlockSpec((1, H2), lambda m: (0, 0)),
            pl.BlockSpec((H2, N), lambda m: (0, 0)),
            pl.BlockSpec((1, N), lambda m: (0, 0)),
        ],
        out_specs=pl.BlockSpec((TB, N), lambda m: (m, 0)),
        compiler_params=pltpu.CompilerParams(
            dimension_semantics=("parallel",)),
        cost_estimate=pl.CostEstimate(
            flops=2 * B_pad * (K * H1 + H1 * H2 + H2 * N),
            transcendentals=0,
            bytes_accessed=4 * (B_pad * K + K * H1 + H1 * H2 + H2 * N
                                + B_pad * N + H1 + H2 + N)),
    )(x, w1, b1, w2, b2, w3, b3)
    return out[:B] if B_pad != B else out


# ---------------------------------------------------------------------------
# Glue (plain JAX): pool-phase patch extraction, parameter prep
# ---------------------------------------------------------------------------

def _pool_phase_patches(a, KH, KW):
    """a: (B, C, H, W) NCHW. Returns ((4, C*KH*KW, B*Hp*Wp), Hp, Wp).

    Phase d=(dh,dw) holds im2col patches for conv-output locations
    (2*hp+dh, 2*wp+dw); feature order k = c*KH*KW + i*KW + j matches
    w.reshape(Cout, C*KH*KW); column order m = b*Hp*Wp + hp*Wp + wp.
    """
    B, C, H, W = a.shape
    Ho, Wo = H - KH + 1, W - KW + 1
    Hp, Wp = Ho // 2, Wo // 2
    shifts = [a[:, :, i:i + Ho, j:j + Wo]
              for i in range(KH) for j in range(KW)]
    s = jnp.stack(shifts, axis=2)                       # (B, C, KH*KW, Ho, Wo)
    phases = []
    for dh in (0, 1):
        for dw in (0, 1):
            p = s[:, :, :, dh::2, dw::2]                # (B, C, KH*KW, Hp, Wp)
            p = p.reshape(B, C * KH * KW, Hp * Wp)
            p = p.transpose(1, 0, 2).reshape(C * KH * KW, B * Hp * Wp)
            phases.append(p)
    return jnp.stack(phases, axis=0), Hp, Wp            # (4, K, B*Hp*Wp)


def prepare_params(params):
    """One-time layout prep: reshape conv weights to (Cout, K), transpose and
    zero-pad FC weights to lane-friendly (K, N) shapes."""
    def pad_to(a, shape):
        return jnp.pad(a, [(0, s - d) for d, s in zip(a.shape, shape)])

    c1w = params['conv1_w']
    c2w = params['conv2_w']
    return {
        'c1_w': c1w.reshape(c1w.shape[0], -1).astype(jnp.float32),   # (6, 75)
        'c1_b': params['conv1_b'].reshape(-1, 1).astype(jnp.float32),
        'c2_w': c2w.reshape(c2w.shape[0], -1).astype(jnp.float32),   # (16, 150)
        'c2_b': params['conv2_b'].reshape(-1, 1).astype(jnp.float32),
        'w1': pad_to(params['fc1_w'].T, (400, 128)),                 # (400, 128)
        'b1': pad_to(params['fc1_b'], (128,)).reshape(1, 128),
        'w2': pad_to(params['fc2_w'].T, (128, 128)),                 # (128, 128)
        'b2': pad_to(params['fc2_b'], (128,)).reshape(1, 128),
        'w3': pad_to(params['fc3_w'].T, (128, 10)),                  # (128, 10)
        'b3': params['fc3_b'].reshape(1, 10),
    }


def net_forward(prep, x):
    """x: (B, 3, 32, 32) float32, NCHW like PyTorch. Returns (B, 10)."""
    B = x.shape[0]

    # conv1 + relu + pool (one kernel)
    p4, Hp, Wp = _pool_phase_patches(x, 5, 5)                  # (4, 75, B*196)
    c1 = prep['c1_w'].shape[0]
    h = conv_relu_pool_pallas(p4, prep['c1_w'], prep['c1_b'])  # (6, B*196)
    h = h.reshape(c1, B, Hp, Wp).transpose(1, 0, 2, 3)         # (B, 6, 14, 14)

    # conv2 + relu + pool (one kernel)
    p4, Hp, Wp = _pool_phase_patches(h, 5, 5)                  # (4, 150, B*25)
    c2 = prep['c2_w'].shape[0]
    h = conv_relu_pool_pallas(p4, prep['c2_w'], prep['c2_b'])  # (16, B*25)
    # PyTorch flattens NCHW -> (B, C*H*W)
    h = (h.reshape(c2, B, Hp, Wp).transpose(1, 0, 2, 3)
         .reshape(B, c2 * Hp * Wp))                            # (B, 400)

    # fc1 -> fc2 -> fc3 (one kernel, weights resident)
    return fc_block_pallas(h, prep['w1'], prep['b1'],
                           prep['w2'], prep['b2'],
                           prep['w3'], prep['b3'])


# Pure-JAX reference (same math) used only for a correctness assertion.
def net_forward_ref(params, x):
    def conv(z, w, b):
        y = lax.conv_general_dilated(z, w, (1, 1), 'VALID',
                                     dimension_numbers=('NCHW', 'OIHW', 'NCHW'))
        return y + b.reshape(1, -1, 1, 1)

    def pool(z):
        return lax.reduce_window(z, -jnp.inf, lax.max,
                                 (1, 1, 2, 2), (1, 1, 2, 2), 'VALID')

    h = pool(jax.nn.relu(conv(x, params['conv1_w'], params['conv1_b'])))
    h = pool(jax.nn.relu(conv(h, params['conv2_w'], params['conv2_b'])))
    h = h.reshape(x.shape[0], -1)
    h = jax.nn.relu(h @ params['fc1_w'].T + params['fc1_b'])
    h = jax.nn.relu(h @ params['fc2_w'].T + params['fc2_b'])
    return h @ params['fc3_w'].T + params['fc3_b']


def init_params(key):
    """Deterministic PyTorch-style uniform(-1/sqrt(fan_in), 1/sqrt(fan_in))."""
    def uni(k, shape, fan_in):
        bound = 1.0 / np.sqrt(fan_in)
        return jax.random.uniform(k, shape, jnp.float32, -bound, bound)

    ks = jax.random.split(key, 10)
    return {
        'conv1_w': uni(ks[0], (6, 3, 5, 5), 3 * 25),
        'conv1_b': uni(ks[1], (6,), 3 * 25),
        'conv2_w': uni(ks[2], (16, 6, 5, 5), 6 * 25),
        'conv2_b': uni(ks[3], (16,), 6 * 25),
        'fc1_w':   uni(ks[4], (120, 400), 400),
        'fc1_b':   uni(ks[5], (120,), 400),
        'fc2_w':   uni(ks[6], (84, 120), 120),
        'fc2_b':   uni(ks[7], (84,), 120),
        'fc3_w':   uni(ks[8], (10, 84), 84),
        'fc3_b':   uni(ks[9], (10,), 84),
    }


if __name__ == "__main__":
    key = jax.random.PRNGKey(0)
    pkey, xkey = jax.random.split(key)
    params = init_params(pkey)
    prep = prepare_params(params)       # one-time weight layout prep

    # Shapes implied by the module: fc1 expects 16*5*5, so input is 3x32x32.
    x = jax.random.normal(xkey, (2, 3, 32, 32), jnp.float32)

    fwd = jax.jit(net_forward)
    out = jax.block_until_ready(fwd(prep, x))

    ref = net_forward_ref(params, x)
    assert out.shape == (2, 10), out.shape
    np.testing.assert_allclose(np.asarray(out), np.asarray(ref),
                               rtol=2e-4, atol=2e-4)
    print("KERNEL_OK")
</pallas_src>

<mosaic_0001>
module attributes {stable_mosaic.version = 11 : i64} {
  func.func @_conv_pool_kernel(%arg0: i32, %arg1: memref<4x75x392xf32, #tpu.memory_space<vmem>>, %arg2: memref<6x75xf32, #tpu.memory_space<vmem>>, %arg3: memref<6x1xf32, #tpu.memory_space<vmem>>, %arg4: memref<6x392xf32, #tpu.memory_space<vmem>>) attributes {dimension_semantics = [#tpu.dimension_semantics<parallel>], iteration_bounds = array<i64: 1>, scalar_prefetch = 0 : i64, scratch_operands = 0 : i64, tpu.core_type = #tpu.core_type<tc>, window_params = [{transform_indices = @transform_0, window_bounds = array<i64: 4, 75, 392>}, {pipeline_mode = #tpu.pipeline_mode<synchronous>, transform_indices = @transform_1, window_bounds = array<i64: 6, 75>}, {pipeline_mode = #tpu.pipeline_mode<synchronous>, transform_indices = @transform_2, window_bounds = array<i64: 6, 1>}, {transform_indices = @transform_3, window_bounds = array<i64: 6, 392>}]} {
    %c0 = arith.constant 0 : index
    %c0_0 = arith.constant 0 : index
    %0 = vector.load %arg2[%c0, %c0_0] : memref<6x75xf32, #tpu.memory_space<vmem>>, vector<6x75xf32>
    %c0_1 = arith.constant 0 : index
    %c0_2 = arith.constant 0 : index
    %c0_3 = arith.constant 0 : index
    %1 = vector.load %arg1[%c0_1, %c0_2, %c0_3] : memref<4x75x392xf32, #tpu.memory_space<vmem>>, vector<1x75x392xf32>
    %2 = vector.shape_cast %1 : vector<1x75x392xf32> to vector<75x392xf32>
    %cst = arith.constant dense<0.000000e+00> : vector<6x392xf32>
    %3 = tpu.matmul %0, %2, %cst {dimension_numbers = #tpu.dot_dimension_numbers<[1], [0], [0], [1], [0, 0, 1, 1], [], []>} : vector<6x75xf32>, vector<75x392xf32>, vector<6x392xf32> -> vector<6x392xf32>
    %c1 = arith.constant 1 : index
    %c0_4 = arith.constant 0 : index
    %c0_5 = arith.constant 0 : index
    %4 = vector.load %arg1[%c1, %c0_4, %c0_5] : memref<4x75x392xf32, #tpu.memory_space<vmem>>, vector<1x75x392xf32>
    %5 = vector.shape_cast %4 : vector<1x75x392xf32> to vector<75x392xf32>
    %cst_6 = arith.constant dense<0.000000e+00> : vector<6x392xf32>
    %6 = tpu.matmul %0, %5, %cst_6 {dimension_numbers = #tpu.dot_dimension_numbers<[1], [0], [0], [1], [0, 0, 1, 1], [], []>} : vector<6x75xf32>, vector<75x392xf32>, vector<6x392xf32> -> vector<6x392xf32>
    %7 = arith.maximumf %3, %6 : vector<6x392xf32>
    %c2 = arith.constant 2 : index
    %c0_7 = arith.constant 0 : index
    %c0_8 = arith.constant 0 : index
    %8 = vector.load %arg1[%c2, %c0_7, %c0_8] : memref<4x75x392xf32, #tpu.memory_space<vmem>>, vector<1x75x392xf32>
    %9 = vector.shape_cast %8 : vector<1x75x392xf32> to vector<75x392xf32>
    %cst_9 = arith.constant dense<0.000000e+00> : vector<6x392xf32>
    %10 = tpu.matmul %0, %9, %cst_9 {dimension_numbers = #tpu.dot_dimension_numbers<[1], [0], [0], [1], [0, 0, 1, 1], [], []>} : vector<6x75xf32>, vector<75x392xf32>, vector<6x392xf32> -> vector<6x392xf32>
    %11 = arith.maximumf %7, %10 : vector<6x392xf32>
    %c3 = arith.constant 3 : index
    %c0_10 = arith.constant 0 : index
    %c0_11 = arith.constant 0 : index
    %12 = vector.load %arg1[%c3, %c0_10, %c0_11] : memref<4x75x392xf32, #tpu.memory_space<vmem>>, vector<1x75x392xf32>
    %13 = vector.shape_cast %12 : vector<1x75x392xf32> to vector<75x392xf32>
    %cst_12 = arith.constant dense<0.000000e+00> : vector<6x392xf32>
    %14 = tpu.matmul %0, %13, %cst_12 {dimension_numbers = #tpu.dot_dimension_numbers<[1], [0], [0], [1], [0, 0, 1, 1], [], []>} : vector<6x75xf32>, vector<75x392xf32>, vector<6x392xf32> -> vector<6x392xf32>
    %15 = arith.maximumf %11, %14 : vector<6x392xf32>
    %c0_13 = arith.constant 0 : index
    %c0_14 = arith.constant 0 : index
    %16 = vector.load %arg3[%c0_13, %c0_14] : memref<6x1xf32, #tpu.memory_space<vmem>>, vector<6x1xf32>
    %17 = vector.broadcast %16 : vector<6x1xf32> to vector<6x392xf32>
    %18 = arith.addf %15, %17 : vector<6x392xf32>
    %cst_15 = arith.constant 0.000000e+00 : f32
    %19 = vector.broadcast %cst_15 : f32 to vector<6x392xf32>
    %20 = arith.maximumf %18, %19 : vector<6x392xf32>
    %c0_16 = arith.constant 0 : index
    %c0_17 = arith.constant 0 : index
    %21 = vector.load %arg4[%c0_16, %c0_17] : memref<6x392xf32, #tpu.memory_space<vmem>>, vector<6x392xf32>
    tpu.vector_store %arg4[%c0_16, %c0_17], %20 {strides = array<i32>} : memref<6x392xf32, #tpu.memory_space<vmem>>, vector<6x392xf32>,
    return
  }
  func.func @transform_0(%arg0: i32) -> (i32, i32, i32) {
    %c0_i32 = arith.constant 0 : i32
    %c0_i32_0 = arith.constant 0 : i32
    %c0_i32_1 = arith.constant 0 : i32
    return %c0_i32, %c0_i32_0, %arg0 : i32, i32, i32
  }
  func.func @transform_1(%arg0: i32) -> (i32, i32) {
    %c0_i32 = arith.constant 0 : i32
    %c0_i32_0 = arith.constant 0 : i32
    %c0_i32_1 = arith.constant 0 : i32
    return %c0_i32, %c0_i32_0 : i32, i32
  }
  func.func @transform_2(%arg0: i32) -> (i32, i32) {
    %c0_i32 = arith.constant 0 : i32
    %c0_i32_0 = arith.constant 0 : i32
    %c0_i32_1 = arith.constant 0 : i32
    return %c0_i32, %c0_i32_0 : i32, i32
  }
  func.func @transform_3(%arg0: i32) -> (i32, i32) {
    %c0_i32 = arith.constant 0 : i32
    %c0_i32_0 = arith.constant 0 : i32
    return %c0_i32, %arg0 : i32, i32
  }
}

module attributes {stable_mosaic.version = 11 : i64} {
  func.func @_conv_pool_kernel(%arg0: i32, %arg1: memref<4x150x50xf32, #tpu.memory_space<vmem>>, %arg2: memref<16x150xf32, #tpu.memory_space<vmem>>, %arg3: memref<16x1xf32, #tpu.memory_space<vmem>>, %arg4: memref<16x50xf32, #tpu.memory_space<vmem>>) attributes {dimension_semantics = [#tpu.dimension_semantics<parallel>], iteration_bounds = array<i64: 1>, scalar_prefetch = 0 : i64, scratch_operands = 0 : i64, tpu.core_type = #tpu.core_type<tc>, window_params = [{transform_indices = @transform_0, window_bounds = array<i64: 4, 150, 50>}, {pipeline_mode = #tpu.pipeline_mode<synchronous>, transform_indices = @transform_1, window_bounds = array<i64: 16, 150>}, {pipeline_mode = #tpu.pipeline_mode<synchronous>, transform_indices = @transform_2, window_bounds = array<i64: 16, 1>}, {transform_indices = @transform_3, window_bounds = array<i64: 16, 50>}]} {
    %c0 = arith.constant 0 : index
    %c0_0 = arith.constant 0 : index
    %0 = vector.load %arg2[%c0, %c0_0] : memref<16x150xf32, #tpu.memory_space<vmem>>, vector<16x150xf32>
    %c0_1 = arith.constant 0 : index
    %c0_2 = arith.constant 0 : index
    %c0_3 = arith.constant 0 : index
    %1 = vector.load %arg1[%c0_1, %c0_2, %c0_3] : memref<4x150x50xf32, #tpu.memory_space<vmem>>, vector<1x150x50xf32>
    %2 = vector.shape_cast %1 : vector<1x150x50xf32> to vector<150x50xf32>
    %cst = arith.constant dense<0.000000e+00> : vector<16x50xf32>
    %3 = tpu.matmul %0, %2, %cst {dimension_numbers = #tpu.dot_dimension_numbers<[1], [0], [0], [1], [0, 0, 1, 1], [], []>} : vector<16x150xf32>, vector<150x50xf32>, vector<16x50xf32> -> vector<16x50xf32>
    %c1 = arith.constant 1 : index
    %c0_4 = arith.constant 0 : index
    %c0_5 = arith.constant 0 : index
    %4 = vector.load %arg1[%c1, %c0_4, %c0_5] : memref<4x150x50xf32, #tpu.memory_space<vmem>>, vector<1x150x50xf32>
    %5 = vector.shape_cast %4 : vector<1x150x50xf32> to vector<150x50xf32>
    %cst_6 = arith.constant dense<0.000000e+00> : vector<16x50xf32>
    %6 = tpu.matmul %0, %5, %cst_6 {dimension_numbers = #tpu.dot_dimension_numbers<[1], [0], [0], [1], [0, 0, 1, 1], [], []>} : vector<16x150xf32>, vector<150x50xf32>, vector<16x50xf32> -> vector<16x50xf32>
    %7 = arith.maximumf %3, %6 : vector<16x50xf32>
    %c2 = arith.constant 2 : index
    %c0_7 = arith.constant 0 : index
    %c0_8 = arith.constant 0 : index
    %8 = vector.load %arg1[%c2, %c0_7, %c0_8] : memref<4x150x50xf32, #tpu.memory_space<vmem>>, vector<1x150x50xf32>
    %9 = vector.shape_cast %8 : vector<1x150x50xf32> to vector<150x50xf32>
    %cst_9 = arith.constant dense<0.000000e+00> : vector<16x50xf32>
    %10 = tpu.matmul %0, %9, %cst_9 {dimension_numbers = #tpu.dot_dimension_numbers<[1], [0], [0], [1], [0, 0, 1, 1], [], []>} : vector<16x150xf32>, vector<150x50xf32>, vector<16x50xf32> -> vector<16x50xf32>
    %11 = arith.maximumf %7, %10 : vector<16x50xf32>
    %c3 = arith.constant 3 : index
    %c0_10 = arith.constant 0 : index
    %c0_11 = arith.constant 0 : index
    %12 = vector.load %arg1[%c3, %c0_10, %c0_11] : memref<4x150x50xf32, #tpu.memory_space<vmem>>, vector<1x150x50xf32>
    %13 = vector.shape_cast %12 : vector<1x150x50xf32> to vector<150x50xf32>
    %cst_12 = arith.constant dense<0.000000e+00> : vector<16x50xf32>
    %14 = tpu.matmul %0, %13, %cst_12 {dimension_numbers = #tpu.dot_dimension_numbers<[1], [0], [0], [1], [0, 0, 1, 1], [], []>} : vector<16x150xf32>, vector<150x50xf32>, vector<16x50xf32> -> vector<16x50xf32>
    %15 = arith.maximumf %11, %14 : vector<16x50xf32>
    %c0_13 = arith.constant 0 : index
    %c0_14 = arith.constant 0 : index
    %16 = vector.load %arg3[%c0_13, %c0_14] : memref<16x1xf32, #tpu.memory_space<vmem>>, vector<16x1xf32>
    %17 = vector.broadcast %16 : vector<16x1xf32> to vector<16x50xf32>
    %18 = arith.addf %15, %17 : vector<16x50xf32>
    %cst_15 = arith.constant 0.000000e+00 : f32
    %19 = vector.broadcast %cst_15 : f32 to vector<16x50xf32>
    %20 = arith.maximumf %18, %19 : vector<16x50xf32>
    %c0_16 = arith.constant 0 : index
    %c0_17 = arith.constant 0 : index
    %21 = vector.load %arg4[%c0_16, %c0_17] : memref<16x50xf32, #tpu.memory_space<vmem>>, vector<16x50xf32>
    tpu.vector_store %arg4[%c0_16, %c0_17], %20 {strides = array<i32>} : memref<16x50xf32, #tpu.memory_space<vmem>>, vector<16x50xf32>,
    return
  }
  func.func @transform_0(%arg0: i32) -> (i32, i32, i32) {
    %c0_i32 = arith.constant 0 : i32
    %c0_i32_0 = arith.constant 0 : i32
    %c0_i32_1 = arith.constant 0 : i32
    return %c0_i32, %c0_i32_0, %arg0 : i32, i32, i32
  }
  func.func @transform_1(%arg0: i32) -> (i32, i32) {
    %c0_i32 = arith.constant 0 : i32
    %c0_i32_0 = arith.constant 0 : i32
    %c0_i32_1 = arith.constant 0 : i32
    return %c0_i32, %c0_i32_0 : i32, i32
  }
  func.func @transform_2(%arg0: i32) -> (i32, i32) {
    %c0_i32 = arith.constant 0 : i32
    %c0_i32_0 = arith.constant 0 : i32
    %c0_i32_1 = arith.constant 0 : i32
    return %c0_i32, %c0_i32_0 : i32, i32
  }
  func.func @transform_3(%arg0: i32) -> (i32, i32) {
    %c0_i32 = arith.constant 0 : i32
    %c0_i32_0 = arith.constant 0 : i32
    return %c0_i32, %arg0 : i32, i32
  }
}

module attributes {stable_mosaic.version = 11 : i64} {
  func.func @_fc_kernel(%arg0: i32, %arg1: memref<2x400xf32, #tpu.memory_space<vmem>>, %arg2: memref<400x128xf32, #tpu.memory_space<vmem>>, %arg3: memref<1x128xf32, #tpu.memory_space<vmem>>, %arg4: memref<128x128xf32, #tpu.memory_space<vmem>>, %arg5: memref<1x128xf32, #tpu.memory_space<vmem>>, %arg6: memref<128x10xf32, #tpu.memory_space<vmem>>, %arg7: memref<1x10xf32, #tpu.memory_space<vmem>>, %arg8: memref<2x10xf32, #tpu.memory_space<vmem>>) attributes {dimension_semantics = [#tpu.dimension_semantics<parallel>], iteration_bounds = array<i64: 1>, scalar_prefetch = 0 : i64, scratch_operands = 0 : i64, tpu.core_type = #tpu.core_type<tc>, window_params = [{transform_indices = @transform_0, window_bounds = array<i64: 2, 400>}, {pipeline_mode = #tpu.pipeline_mode<synchronous>, transform_indices = @transform_1, window_bounds = array<i64: 400, 128>}, {pipeline_mode = #tpu.pipeline_mode<synchronous>, transform_indices = @transform_2, window_bounds = array<i64: 1, 128>}, {pipeline_mode = #tpu.pipeline_mode<synchronous>, transform_indices = @transform_3, window_bounds = array<i64: 128, 128>}, {pipeline_mode = #tpu.pipeline_mode<synchronous>, transform_indices = @transform_4, window_bounds = array<i64: 1, 128>}, {pipeline_mode = #tpu.pipeline_mode<synchronous>, transform_indices = @transform_5, window_bounds = array<i64: 128, 10>}, {pipeline_mode = #tpu.pipeline_mode<synchronous>, transform_indices = @transform_6, window_bounds = array<i64: 1, 10>}, {transform_indices = @transform_7, window_bounds = array<i64: 2, 10>}]} {
    %c0 = arith.constant 0 : index
    %c0_0 = arith.constant 0 : index
    %0 = vector.load %arg1[%c0, %c0_0] : memref<2x400xf32, #tpu.memory_space<vmem>>, vector<2x400xf32>
    %c0_1 = arith.constant 0 : index
    %c0_2 = arith.constant 0 : index
    %1 = vector.load %arg2[%c0_1, %c0_2] : memref<400x128xf32, #tpu.memory_space<vmem>>, vector<400x128xf32>
    %cst = arith.constant dense<0.000000e+00> : vector<2x128xf32>
    %2 = tpu.matmul %0, %1, %cst {dimension_numbers = #tpu.dot_dimension_numbers<[1], [0], [0], [1], [0, 0, 1, 1], [], []>} : vector<2x400xf32>, vector<400x128xf32>, vector<2x128xf32> -> vector<2x128xf32>
    %c0_3 = arith.constant 0 : index
    %c0_4 = arith.constant 0 : index
    %3 = vector.load %arg3[%c0_3, %c0_4] : memref<1x128xf32, #tpu.memory_space<vmem>>, vector<1x128xf32>
    %4 = vector.broadcast %3 : vector<1x128xf32> to vector<2x128xf32>
    %5 = arith.addf %2, %4 : vector<2x128xf32>
    %cst_5 = arith.constant 0.000000e+00 : f32
    %6 = vector.broadcast %cst_5 : f32 to vector<2x128xf32>
    %7 = arith.maximumf %5, %6 : vector<2x128xf32>
    %c0_6 = arith.constant 0 : index
    %c0_7 = arith.constant 0 : index
    %8 = vector.load %arg4[%c0_6, %c0_7] : memref<128x128xf32, #tpu.memory_space<vmem>>, vector<128x128xf32>
    %cst_8 = arith.constant dense<0.000000e+00> : vector<2x128xf32>
    %9 = tpu.matmul %7, %8, %cst_8 {dimension_numbers = #tpu.dot_dimension_numbers<[1], [0], [0], [1], [0, 0, 1, 1], [], []>} : vector<2x128xf32>, vector<128x128xf32>, vector<2x128xf32> -> vector<2x128xf32>
    %c0_9 = arith.constant 0 : index
    %c0_10 = arith.constant 0 : index
    %10 = vector.load %arg5[%c0_9, %c0_10] : memref<1x128xf32, #tpu.memory_space<vmem>>, vector<1x128xf32>
    %11 = vector.broadcast %10 : vector<1x128xf32> to vector<2x128xf32>
    %12 = arith.addf %9, %11 : vector<2x128xf32>
    %cst_11 = arith.constant 0.000000e+00 : f32
    %13 = vector.broadcast %cst_11 : f32 to vector<2x128xf32>
    %14 = arith.maximumf %12, %13 : vector<2x128xf32>
    %c0_12 = arith.constant 0 : index
    %c0_13 = arith.constant 0 : index
    %15 = vector.load %arg6[%c0_12, %c0_13] : memref<128x10xf32, #tpu.memory_space<vmem>>, vector<128x10xf32>
    %cst_14 = arith.constant dense<0.000000e+00> : vector<2x10xf32>
    %16 = tpu.matmul %14, %15, %cst_14 {dimension_numbers = #tpu.dot_dimension_numbers<[1], [0], [0], [1], [0, 0, 1, 1], [], []>} : vector<2x128xf32>, vector<128x10xf32>, vector<2x10xf32> -> vector<2x10xf32>
    %c0_15 = arith.constant 0 : index
    %c0_16 = arith.constant 0 : index
    %17 = vector.load %arg7[%c0_15, %c0_16] : memref<1x10xf32, #tpu.memory_space<vmem>>, vector<1x10xf32>
    %18 = vector.broadcast %17 : vector<1x10xf32> to vector<2x10xf32>
    %19 = arith.addf %16, %18 : vector<2x10xf32>
    %c0_17 = arith.constant 0 : index
    %c0_18 = arith.constant 0 : index
    %20 = vector.load %arg8[%c0_17, %c0_18] : memref<2x10xf32, #tpu.memory_space<vmem>>, vector<2x10xf32>
    tpu.vector_store %arg8[%c0_17, %c0_18], %19 {strides = array<i32>} : memref<2x10xf32, #tpu.memory_space<vmem>>, vector<2x10xf32>,
    return
  }
  func.func @transform_0(%arg0: i32) -> (i32, i32) {
    %c0_i32 = arith.constant 0 : i32
    %c0_i32_0 = arith.constant 0 : i32
    return %arg0, %c0_i32 : i32, i32
  }
  func.func @transform_1(%arg0: i32) -> (i32, i32) {
    %c0_i32 = arith.constant 0 : i32
    %c0_i32_0 = arith.constant 0 : i32
    %c0_i32_1 = arith.constant 0 : i32
    return %c0_i32, %c0_i32_0 : i32, i32
  }
  func.func @transform_2(%arg0: i32) -> (i32, i32) {
    %c0_i32 = arith.constant 0 : i32
    %c0_i32_0 = arith.constant 0 : i32
    %c0_i32_1 = arith.constant 0 : i32
    return %c0_i32, %c0_i32_0 : i32, i32
  }
  func.func @transform_3(%arg0: i32) -> (i32, i32) {
    %c0_i32 = arith.constant 0 : i32
    %c0_i32_0 = arith.constant 0 : i32
    %c0_i32_1 = arith.constant 0 : i32
    return %c0_i32, %c0_i32_0 : i32, i32
  }
  func.func @transform_4(%arg0: i32) -> (i32, i32) {
    %c0_i32 = arith.constant 0 : i32
    %c0_i32_0 = arith.constant 0 : i32
    %c0_i32_1 = arith.constant 0 : i32
    return %c0_i32, %c0_i32_0 : i32, i32
  }
  func.func @transform_5(%arg0: i32) -> (i32, i32) {
    %c0_i32 = arith.constant 0 : i32
    %c0_i32_0 = arith.constant 0 : i32
    %c0_i32_1 = arith.constant 0 : i32
    return %c0_i32, %c0_i32_0 : i32, i32
  }
  func.func @transform_6(%arg0: i32) -> (i32, i32) {
    %c0_i32 = arith.constant 0 : i32
    %c0_i32_0 = arith.constant 0 : i32
    %c0_i32_1 = arith.constant 0 : i32
    return %c0_i32, %c0_i32_0 : i32, i32
  }
  func.func @transform_7(%arg0: i32) -> (i32, i32) {
    %c0_i32 = arith.constant 0 : i32
    %c0_i32_0 = arith.constant 0 : i32
    return %arg0, %c0_i32 : i32, i32
  }
}

</mosaic_0001>

<llo_original>
// kernel: net_forward.3
$region0: #{net_forward.3}
  #allocation0 [shape = 'u32[]', space=smem, size = 0x4, offset = 0x4, fixed_abs, tag = 'smem constant byte address 0x4 - core index']
  #allocation1 [shape = 'u32[144,128]{1,0:T(1,128)}', space=vmem, size = 0x12000, scoped, tag = 'internal scratch']
  %s0 = inlined_call_operand.vmem [shape: f32[4,75,392], index: 0, kind: input, shape index: {}]
  %s1 = inlined_call_operand.vmem [shape: f32[6,75], index: 1, kind: input, shape index: {}]
  %s2 = inlined_call_operand.vmem [shape: f32[6,1], index: 2, kind: input, shape index: {}]
  %s3 = inlined_call_operand.vmem [shape: f32[6,392], index: 3, kind: output, shape index: {}]
  %s4 = sld [smem:[#allocation0]]
  $region22: #{net_forward.3} parent=0
    _
  %s6 = ssub.s32 1, %s4
  %s7 = scalar_select 0, %s6, %s4
  // Predicated region
  $region2: #{net_forward.3} parent=0 // pred_check
    _
  $region3: #{net_forward.3} parent=0 // pred_check_branch
    %9 = sbr.rel (0) target = $region5
  $region4: #{net_forward.3} parent=0 // pred_region
    _
  $region5: #{net_forward.3} parent=0 // pred_fallthru
    _
  // Predicated region
  $region6: #{net_forward.3} parent=0 // pred_check
    _
  $region7: #{net_forward.3} parent=0 // pred_check_branch
    %11 = sbr.rel (0) target = $region9
  $region8: #{net_forward.3} parent=0 // pred_region
    _
  $region9: #{net_forward.3} parent=0 // pred_fallthru
    _
  // Predicated region
  $region10: #{net_forward.3} parent=0 // pred_check
    _
  $region11: #{net_forward.3} parent=0 // pred_check_branch
    %13 = sbr.rel (0) target = $region13
  $region12: #{net_forward.3} parent=0 // pred_region
    _
  $region13: #{net_forward.3} parent=0 // pred_fallthru
    _
  %v14 = vld [vmem:[%s1] sm:$0x3f]
  %v15 = vld [vmem:[%s0] sm:$0xff]
  %v16 = vld [vmem:[%s0 + $0x8] sm:$0xff]
  %v17 = vld [vmem:[%s0 + $0x10] sm:$0xff]
  %v18 = vld [vmem:[%s0 + $0x18] sm:$0xff]
  %v19 = vld [vmem:[%s0 + $0x20] sm:$0xff]
  %v20 = vld [vmem:[%s0 + $0x28] sm:$0xff]
  %v21 = vld [vmem:[%s0 + $0x30] sm:$0xff]
  %v22 = vld [vmem:[%s0 + $0x38] sm:$0xff]
  %v23 = vld [vmem:[%s0 + $0x40] sm:$0xff]
  %v24 = vld [vmem:[%s0 + $0x48] sm:$0xff]
  %v25 = vld [vmem:[%s0 + $0x50] sm:$0xff]
  %v26 = vld [vmem:[%s0 + $0x58] sm:$0xff]
  %v27 = vld [vmem:[%s0 + $0x60] sm:$0xff]
  %v28 = vld [vmem:[%s0 + $0x68] sm:$0xff]
  %v29 = vld [vmem:[%s0 + $0x70] sm:$0xff]
  %v30 = vld [vmem:[%s0 + $0x78] sm:$0xff]
  %v31 = vld [vmem:[%s0 + $0x80] sm:$0xff]
  %v32 = vld [vmem:[%s0 + $0x88] sm:$0xff]
  %v33 = vld [vmem:[%s0 + $0x90] sm:$0xff]
  %v34 = vld [vmem:[%s0 + $0x98] sm:$0xff]
  %v35 = vld [vmem:[%s0 + $0xa0] sm:$0xff]
  %v36 = vld [vmem:[%s0 + $0xa8] sm:$0xff]
  %v37 = vld [vmem:[%s0 + $0xb0] sm:$0xff]
  %v38 = vld [vmem:[%s0 + $0xb8] sm:$0xff]
  %v39 = vld [vmem:[%s0 + $0xc0] sm:$0xff]
  %v40 = vld [vmem:[%s0 + $0xc8] sm:$0xff]
  %v41 = vld [vmem:[%s0 + $0xd0] sm:$0xff]
  %v42 = vld [vmem:[%s0 + $0xd8] sm:$0xff]
  %v43 = vld [vmem:[%s0 + $0xe0] sm:$0xff]
  %v44 = vld [vmem:[%s0 + $0xe8] sm:$0xff]
  %v45 = vld [vmem:[%s0 + $0xf0] sm:$0xff]
  %v46 = vld [vmem:[%s0 + $0xf8] sm:$0xff]
  %v47 = vld [vmem:[%s0 + $0x100] sm:$0xff]
  %v48 = vld [vmem:[%s0 + $0x108] sm:$0xff]
  %v49 = vld [vmem:[%s0 + $0x110] sm:$0xff]
  %v50 = vld [vmem:[%s0 + $0x118] sm:$0xff]
  %v51 = vld [vmem:[%s0 + $0x120] sm:$0x7]
  %v52 = vld [vmem:[%s0 + $0x128] sm:$0x7]
  %v53 = vld [vmem:[%s0 + $0x130] sm:$0x7]
  %v54 = vld [vmem:[%s0 + $0x138] sm:$0x7]
  %vm55 = vcmask 613376
  %v57 = vsel %vm55, %v14, 0
  %vm59 = vcmask 1042432
  %v61 = vsel %vm59, %v51, 0
  %v64 = vsel %vm59, %v52, 0
  %v67 = vsel %vm59, %v53, 0
  %v70 = vsel %vm59, %v54, 0
  %72 = vmatprep.subr.mxu0 %v16
  %73 = vmatpush1.msra.mxu0 %v15
  %74 = vmatprep.subr.mxu0 %v20
  %75 = vmatpush1.msra.mxu0 %v19
  %76 = vmatprep.subr.mxu0 %v24
  %77 = vmatpush1.msra.mxu0 %v23
  %78 = vmatprep.subr.mxu0 %v28
  %79 = vmatpush1.msra.mxu0 %v27
  %80 = vmatprep.subr.mxu0 %v32
  %81 = vmatpush1.msra.mxu0 %v31
  %82 = vmatprep.subr.mxu0 %v36
  %83 = vmatpush1.msra.mxu0 %v35
  %84 = vmatprep.subr.mxu0 %v40
  %85 = vmatpush1.msra.mxu0 %v39
  %86 = vmatprep.subr.mxu0 %v44
  %87 = vmatpush1.msra.mxu0 %v43
  %88 = vmatprep.subr.mxu0 %v48
  %89 = vmatpush1.msra.mxu0 %v47
  %90 = vmatprep.subr.mxu0 %v64
  %91 = vmatpush1.msra.mxu0 %v61
  %92 = vmatprep.subr.mxu0 0.0
  %93 = vmatpush1.msra.mxu0 0.0
  %94 = vmatprep.subr.mxu0 0.0
  %95 = vmatpush1.msra.mxu0 0.0
  %96 = vmatprep.subr.mxu0 0.0
  %97 = vmatpush1.msra.mxu0 0.0
  %98 = vmatprep.subr.mxu0 0.0
  %99 = vmatpush1.msra.mxu0 0.0
  %100 = vmatprep.subr.mxu0 0.0
  %101 = vmatpush1.msra.mxu0 0.0
  %102 = vmatprep.subr.mxu0 0.0
  %103 = vmatpush1.msra.mxu0 0.0
  %104 = vmatprep.subr.mxu0 0.0
  %105 = vmatpush1.msra.mxu0 0.0
  %106 = vmatprep.subr.mxu0 0.0
  %107 = vmatpush1.msra.mxu0 0.0
  %108 = vmatprep.subr.mxu0 0.0
  %109 = vmatpush1.msra.mxu0 0.0
  %110 = vmatprep.subr.mxu0 0.0
  %111 = vmatpush1.msra.mxu0 0.0
  %112 = vmatprep.subr.mxu0 0.0
  %113 = vmatpush1.msra.mxu0 0.0
  %114 = vmatprep.subr.mxu0 0.0
  %115 = vmatpush1.msra.mxu0 0.0
  %116 = vmatprep.subr.mxu0 0.0
  %117 = vmatpush1.msra.mxu0 0.0
  %118 = vmatprep.subr.mxu0 0.0
  %119 = vmatpush1.msra.mxu0 0.0
  %120 = vmatprep.subr.mxu0 0.0
  %121 = vmatpush1.msra.mxu0 0.0
  %122 = vmatprep.subr.mxu0 0.0
  %123 = vmatpush1.msra.mxu0 0.0
  %124 = vmatprep.subr.mxu0 0.0
  %125 = vmatpush1.msra.mxu0 0.0
  %126 = vmatprep.subr.mxu0 0.0
  %127 = vmatpush1.msra.mxu0 0.0
  %128 = vmatprep.subr.mxu0 0.0
  %129 = vmatpush1.msra.mxu0 0.0
  %130 = vmatprep.subr.mxu0 0.0
  %131 = vmatpush1.msra.mxu0 0.0
  %132 = vmatprep.subr.mxu0 0.0
  %133 = vmatpush1.msra.mxu0 0.0
  %134 = vmatprep.subr.mxu0 0.0
  %135 = vmatpush1.msra.mxu0 0.0
  %136 = vmatprep.mubr.f32.mxu0 0.0
  %137 = vmatmul.mubr.f32.gmra.mrb[0].mxu0 %v57
  %v138 = vpop.f32.mrb[0].mxu0
  %v139 = vadd.f32 0.0, %v138
  %v140 = vpop.f32.mrb[0].mxu0
  %v141 = vadd.f32 0.0, %v140
  %142 = vdwg.mxu0
  %143 = vmatprep.subr.mxu0 %v18
  %144 = vmatpush1.msra.mxu0 %v17
  %145 = vmatprep.subr.mxu0 %v22
  %146 = vmatpush1.msra.mxu0 %v21
  %147 = vmatprep.subr.mxu0 %v26
  %148 = vmatpush1.msra.mxu0 %v25
  %149 = vmatprep.subr.mxu0 %v30
  %150 = vmatpush1.msra.mxu0 %v29
  %151 = vmatprep.subr.mxu0 %v34
  %152 = vmatpush1.msra.mxu0 %v33
  %153 = vmatprep.subr.mxu0 %v38
  %154 = vmatpush1.msra.mxu0 %v37
  %155 = vmatprep.subr.mxu0 %v42
  %156 = vmatpush1.msra.mxu0 %v41
  %157 = vmatprep.subr.mxu0 %v46
  %158 = vmatpush1.msra.mxu0 %v45
  %159 = vmatprep.subr.mxu0 %v50
  %160 = vmatpush1.msra.mxu0 %v49
  %161 = vmatprep.subr.mxu0 %v70
  %162 = vmatpush1.msra.mxu0 %v67
  %163 = vmatprep.subr.mxu0 0.0
  %164 = vmatpush1.msra.mxu0 0.0
  %165 = vmatprep.subr.mxu0 0.0
  %166 = vmatpush1.msra.mxu0 0.0
  %167 = vmatprep.subr.mxu0 0.0
  %168 = vmatpush1.msra.mxu0 0.0
  %169 = vmatprep.subr.mxu0 0.0
  %170 = vmatpush1.msra.mxu0 0.0
  %171 = vmatprep.subr.mxu0 0.0
  %172 = vmatpush1.msra.mxu0 0.0
  %173 = vmatprep.subr.mxu0 0.0
  %174 = vmatpush1.msra.mxu0 0.0
  %175 = vmatprep.subr.mxu0 0.0
  %176 = vmatpush1.msra.mxu0 0.0
  %177 = vmatprep.subr.mxu0 0.0
  %178 = vmatpush1.msra.mxu0 0.0
  %179 = vmatprep.subr.mxu0 0.0
  %180 = vmatpush1.msra.mxu0 0.0
  %181 = vmatprep.subr.mxu0 0.0
  %182 = vmatpush1.msra.mxu0 0.0
  %183 = vmatprep.subr.mxu0 0.0
  %184 = vmatpush1.msra.mxu0 0.0
  %185 = vmatprep.subr.mxu0 0.0
  %186 = vmatpush1.msra.mxu0 0.0
  %187 = vmatprep.subr.mxu0 0.0
  %188 = vmatpush1.msra.mxu0 0.0
  %189 = vmatprep.subr.mxu0 0.0
  %190 = vmatpush1.msra.mxu0 0.0
  %191 = vmatprep.subr.mxu0 0.0
  %192 = vmatpush1.msra.mxu0 0.0
  %193 = vmatprep.subr.mxu0 0.0
  %194 = vmatpush1.msra.mxu0 0.0
  %195 = vmatprep.subr.mxu0 0.0
  %196 = vmatpush1.msra.mxu0 0.0
  %197 = vmatprep.subr.mxu0 0.0
  %198 = vmatpush1.msra.mxu0 0.0
  %199 = vmatprep.subr.mxu0 0.0
  %200 = vmatpush1.msra.mxu0 0.0
  %201 = vmatprep.subr.mxu0 0.0
  %202 = vmatpush1.msra.mxu0 0.0
  %203 = vmatprep.subr.mxu0 0.0
  %204 = vmatpush1.msra.mxu0 0.0
  %205 = vmatprep.subr.mxu0 0.0
  %206 = vmatpush1.msra.mxu0 0.0
  %207 = vmatprep.mubr.f32.mxu0 0.0
  %208 = vmatmul.mubr.f32.gmra.mrb[0].mxu0 %v57
  %v209 = vpop.f32.mrb[0].mxu0
  %v210 = vadd.f32 0.0, %v209
  %v211 = vpop.f32.mrb[0].mxu0
  %v212 = vadd.f32 0.0, %v211
  %213 = vdwg.mxu0
  %s214 = scalar_lea.vmem %s0, 320
  %v215 = vld [vmem:[%s214] sm:$0xff]
  %v216 = vld [vmem:[%s214 + $0x8] sm:$0xff]
  %v217 = vld [vmem:[%s214 + $0x10] sm:$0xff]
  %v218 = vld [vmem:[%s214 + $0x18] sm:$0xff]
  %v219 = vld [vmem:[%s214 + $0x20] sm:$0xff]
  %v220 = vld [vmem:[%s214 + $0x28] sm:$0xff]
  %v221 = vld [vmem:[%s214 + $0x30] sm:$0xff]
  %v222 = vld [vmem:[%s214 + $0x38] sm:$0xff]
  %v223 = vld [vmem:[%s214 + $0x40] sm:$0xff]
  %v224 = vld [vmem:[%s214 + $0x48] sm:$0xff]
  %v225 = vld [vmem:[%s214 + $0x50] sm:$0xff]
  %v226 = vld [vmem:[%s214 + $0x58] sm:$0xff]
  %v227 = vld [vmem:[%s214 + $0x60] sm:$0xff]
  %v228 = vld [vmem:[%s214 + $0x68] sm:$0xff]
  %v229 = vld [vmem:[%s214 + $0x70] sm:$0xff]
  %v230 = vld [vmem:[%s214 + $0x78] sm:$0xff]
  %v231 = vld [vmem:[%s214 + $0x80] sm:$0xff]
  %v232 = vld [vmem:[%s214 + $0x88] sm:$0xff]
  %v233 = vld [vmem:[%s214 + $0x90] sm:$0xff]
  %v234 = vld [vmem:[%s214 + $0x98] sm:$0xff]
  %v235 = vld [vmem:[%s214 + $0xa0] sm:$0xff]
  %v236 = vld [vmem:[%s214 + $0xa8] sm:$0xff]
  %v237 = vld [vmem:[%s214 + $0xb0] sm:$0xff]
  %v238 = vld [vmem:[%s214 + $0xb8] sm:$0xff]
  %v239 = vld [vmem:[%s214 + $0xc0] sm:$0xff]
  %v240 = vld [vmem:[%s214 + $0xc8] sm:$0xff]
  %v241 = vld [vmem:[%s214 + $0xd0] sm:$0xff]
  %v242 = vld [vmem:[%s214 + $0xd8] sm:$0xff]
  %v243 = vld [vmem:[%s214 + $0xe0] sm:$0xff]
  %v244 = vld [vmem:[%s214 + $0xe8] sm:$0xff]
  %v245 = vld [vmem:[%s214 + $0xf0] sm:$0xff]
  %v246 = vld [vmem:[%s214 + $0xf8] sm:$0xff]
  %v247 = vld [vmem:[%s214 + $0x100] sm:$0xff]
  %v248 = vld [vmem:[%s214 + $0x108] sm:$0xff]
  %v249 = vld [vmem:[%s214 + $0x110] sm:$0xff]
  %v250 = vld [vmem:[%s214 + $0x118] sm:$0xff]
  %v251 = vld [vmem:[%s214 + $0x120] sm:$0x7]
  %v252 = vld [vmem:[%s214 + $0x128] sm:$0x7]
  %v253 = vld [vmem:[%s214 + $0x130] sm:$0x7]
  %v254 = vld [vmem:[%s214 + $0x138] sm:$0x7]
  %v256 = vsel %vm59, %v251, 0
  %v259 = vsel %vm59, %v252, 0
  %v262 = vsel %vm59, %v253, 0
  %v265 = vsel %vm59, %v254, 0
  %267 = vmatprep.subr.mxu0 %v216
  %268 = vmatpush1.msra.mxu0 %v215
  %269 = vmatprep.subr.mxu0 %v220
  %270 = vmatpush1.msra.mxu0 %v219
  %271 = vmatprep.subr.mxu0 %v224
  %272 = vmatpush1.msra.mxu0 %v223
  %273 = vmatprep.subr.mxu0 %v228
  %274 = vmatpush1.msra.mxu0 %v227
  %275 = vmatprep.subr.mxu0 %v232
  %276 = vmatpush1.msra.mxu0 %v231
  %277 = vmatprep.subr.mxu0 %v236
  %278 = vmatpush1.msra.mxu0 %v235
  %279 = vmatprep.subr.mxu0 %v240
  %280 = vmatpush1.msra.mxu0 %v239
  %281 = vmatprep.subr.mxu0 %v244
  %282 = vmatpush1.msra.mxu0 %v243
  %283 = vmatprep.subr.mxu0 %v248
  %284 = vmatpush1.msra.mxu0 %v247
  %285 = vmatprep.subr.mxu0 %v259
  %286 = vmatpush1.msra.mxu0 %v256
  %287 = vmatprep.subr.mxu0 0.0
  %288 = vmatpush1.msra.mxu0 0.0
  %289 = vmatprep.subr.mxu0 0.0
  %290 = vmatpush1.msra.mxu0 0.0
  %291 = vmatprep.subr.mxu0 0.0
  %292 = vmatpush1.msra.mxu0 0.0
  %293 = vmatprep.subr.mxu0 0.0
  %294 = vmatpush1.msra.mxu0 0.0
  %295 = vmatprep.subr.mxu0 0.0
  %296 = vmatpush1.msra.mxu0 0.0
  %297 = vmatprep.subr.mxu0 0.0
  %298 = vmatpush1.msra.mxu0 0.0
  %299 = vmatprep.subr.mxu0 0.0
  %300 = vmatpush1.msra.mxu0 0.0
  %301 = vmatprep.subr.mxu0 0.0
  %302 = vmatpush1.msra.mxu0 0.0
  %303 = vmatprep.subr.mxu0 0.0
  %304 = vmatpush1.msra.mxu0 0.0
  %305 = vmatprep.subr.mxu0 0.0
  %306 = vmatpush1.msra.mxu0 0.0
  %307 = vmatprep.subr.mxu0 0.0
  %308 = vmatpush1.msra.mxu0 0.0
  %309 = vmatprep.subr.mxu0 0.0
  %310 = vmatpush1.msra.mxu0 0.0
  %311 = vmatprep.subr.mxu0 0.0
  %312 = vmatpush1.msra.mxu0 0.0
  %313 = vmatprep.subr.mxu0 0.0
  %314 = vmatpush1.msra.mxu0 0.0
  %315 = vmatprep.subr.mxu0 0.0
  %316 = vmatpush1.msra.mxu0 0.0
  %317 = vmatprep.subr.mxu0 0.0
  %318 = vmatpush1.msra.mxu0 0.0
  %319 = vmatprep.subr.mxu0 0.0
  %320 = vmatpush1.msra.mxu0 0.0
  %321 = vmatprep.subr.mxu0 0.0
  %322 = vmatpush1.msra.mxu0 0.0
  %323 = vmatprep.subr.mxu0 0.0
  %324 = vmatpush1.msra.mxu0 0.0
  %325 = vmatprep.subr.mxu0 0.0
  %326 = vmatpush1.msra.mxu0 0.0
  %327 = vmatprep.subr.mxu0 0.0
  %328 = vmatpush1.msra.mxu0 0.0
  %329 = vmatprep.subr.mxu0 0.0
  %330 = vmatpush1.msra.mxu0 0.0
  %331 = vmatprep.mubr.f32.mxu0 0.0
  %332 = vmatmul.mubr.f32.gmra.mrb[0].mxu0 %v57
  %v333 = vpop.f32.mrb[0].mxu0
  %v334 = vadd.f32 0.0, %v333
  %v335 = vpop.f32.mrb[0].mxu0
  %v336 = vadd.f32 0.0, %v335
  %337 = vdwg.mxu0
  %338 = vmatprep.subr.mxu0 %v218
  %339 = vmatpush1.msra.mxu0 %v217
  %340 = vmatprep.subr.mxu0 %v222
  %341 = vmatpush1.msra.mxu0 %v221
  %342 = vmatprep.subr.mxu0 %v226
  %343 = vmatpush1.msra.mxu0 %v225
  %344 = vmatprep.subr.mxu0 %v230
  %345 = vmatpush1.msra.mxu0 %v229
  %346 = vmatprep.subr.mxu0 %v234
  %347 = vmatpush1.msra.mxu0 %v233
  %348 = vmatprep.subr.mxu0 %v238
  %349 = vmatpush1.msra.mxu0 %v237
  %350 = vmatprep.subr.mxu0 %v242
  %351 = vmatpush1.msra.mxu0 %v241
  %352 = vmatprep.subr.mxu0 %v246
  %353 = vmatpush1.msra.mxu0 %v245
  %354 = vmatprep.subr.mxu0 %v250
  %355 = vmatpush1.msra.mxu0 %v249
  %356 = vmatprep.subr.mxu0 %v265
  %357 = vmatpush1.msra.mxu0 %v262
  %358 = vmatprep.subr.mxu0 0.0
  %359 = vmatpush1.msra.mxu0 0.0
  %360 = vmatprep.subr.mxu0 0.0
  %361 = vmatpush1.msra.mxu0 0.0
  %362 = vmatprep.subr.mxu0 0.0
  %363 = vmatpush1.msra.mxu0 0.0
  %364 = vmatprep.subr.mxu0 0.0
  %365 = vmatpush1.msra.mxu0 0.0
  %366 = vmatprep.subr.mxu0 0.0
  %367 = vmatpush1.msra.mxu0 0.0
  %368 = vmatprep.subr.mxu0 0.0
  %369 = vmatpush1.msra.mxu0 0.0
  %370 = vmatprep.subr.mxu0 0.0
  %371 = vmatpush1.msra.mxu0 0.0
  %372 = vmatprep.subr.mxu0 0.0
  %373 = vmatpush1.msra.mxu0 0.0
  %374 = vmatprep.subr.mxu0 0.0
  %375 = vmatpush1.msra.mxu0 0.0
  %376 = vmatprep.subr.mxu0 0.0
  %377 = vmatpush1.msra.mxu0 0.0
  %378 = vmatprep.subr.mxu0 0.0
  %379 = vmatpush1.msra.mxu0 0.0
  %380 = vmatprep.subr.mxu0 0.0
  %381 = vmatpush1.msra.mxu0 0.0
  %382 = vmatprep.subr.mxu0 0.0
  %383 = vmatpush1.msra.mxu0 0.0
  %384 = vmatprep.subr.mxu0 0.0
  %385 = vmatpush1.msra.mxu0 0.0
  %386 = vmatprep.subr.mxu0 0.0
  %387 = vmatpush1.msra.mxu0 0.0
  %388 = vmatprep.subr.mxu0 0.0
  %389 = vmatpush1.msra.mxu0 0.0
  %390 = vmatprep.subr.mxu0 0.0
  %391 = vmatpush1.msra.mxu0 0.0
  %392 = vmatprep.subr.mxu0 0.0
  %393 = vmatpush1.msra.mxu0 0.0
  %394 = vmatprep.subr.mxu0 0.0
  %395 = vmatpush1.msra.mxu0 0.0
  %396 = vmatprep.subr.mxu0 0.0
  %397 = vmatpush1.msra.mxu0 0.0
  %398 = vmatprep.subr.mxu0 0.0
  %399 = vmatpush1.msra.mxu0 0.0
  %400 = vmatprep.subr.mxu0 0.0
  %401 = vmatpush1.msra.mxu0 0.0
  %402 = vmatprep.mubr.f32.mxu0 0.0
  %403 = vmatmul.mubr.f32.gmra.mrb[0].mxu0 %v57
  %v404 = vpop.f32.mrb[0].mxu0
  %v405 = vadd.f32 0.0, %v404
  %v406 = vpop.f32.mrb[0].mxu0
  %v407 = vadd.f32 0.0, %v406
  %408 = vdwg.mxu0
  %v409 = vmax.f32 %v139, %v334
  %v410 = vmax.f32 %v141, %v336
  %v411 = vmax.f32 %v210, %v405
  %v412 = vmax.f32 %v212, %v407
  %s413 = scalar_lea.vmem %s0, 640
  %v414 = vld [vmem:[%s413] sm:$0xff]
  %v415 = vld [vmem:[%s413 + $0x8] sm:$0xff]
  %v416 = vld [vmem:[%s413 + $0x10] sm:$0xff]
  %v417 = vld [vmem:[%s413 + $0x18] sm:$0xff]
  %v418 = vld [vmem:[%s413 + $0x20] sm:$0xff]
  %v419 = vld [vmem:[%s413 + $0x28] sm:$0xff]
  %v420 = vld [vmem:[%s413 + $0x30] sm:$0xff]
  %v421 = vld [vmem:[%s413 + $0x38] sm:$0xff]
  %v422 = vld [vmem:[%s413 + $0x40] sm:$0xff]
  %v423 = vld [vmem:[%s413 + $0x48] sm:$0xff]
  %v424 = vld [vmem:[%s413 + $0x50] sm:$0xff]
  %v425 = vld [vmem:[%s413 + $0x58] sm:$0xff]
  %v426 = vld [vmem:[%s413 + $0x60] sm:$0xff]
  %v427 = vld [vmem:[%s413 + $0x68] sm:$0xff]
  %v428 = vld [vmem:[%s413 + $0x70] sm:$0xff]
  %v429 = vld [vmem:[%s413 + $0x78] sm:$0xff]
  %v430 = vld [vmem:[%s413 + $0x80] sm:$0xff]
  %v431 = vld [vmem:[%s413 + $0x88] sm:$0xff]
  %v432 = vld [vmem:[%s413 + $0x90] sm:$0xff]
  %v433 = vld [vmem:[%s413 + $0x98] sm:$0xff]
  %v434 = vld [vmem:[%s413 + $0xa0] sm:$0xff]
  %v435 = vld [vmem:[%s413 + $0xa8] sm:$0xff]
  %v436 = vld [vmem:[%s413 + $0xb0] sm:$0xff]
  %v437 = vld [vmem:[%s413 + $0xb8] sm:$0xff]
  %v438 = vld [vmem:[%s413 + $0xc0] sm:$0xff]
  %v439 = vld [vmem:[%s413 + $0xc8] sm:$0xff]
  %v440 = vld [vmem:[%s413 + $0xd0] sm:$0xff]
  %v441 = vld [vmem:[%s413 + $0xd8] sm:$0xff]
  %v442 = vld [vmem:[%s413 + $0xe0] sm:$0xff]
  %v443 = vld [vmem:[%s413 + $0xe8] sm:$0xff]
  %v444 = vld [vmem:[%s413 + $0xf0] sm:$0xff]
  %v445 = vld [vmem:[%s413 + $0xf8] sm:$0xff]
  %v446 = vld [vmem:[%s413 + $0x100] sm:$0xff]
  %v447 = vld [vmem:[%s413 + $0x108] sm:$0xff]
  %v448 = vld [vmem:[%s413 + $0x110] sm:$0xff]
  %v449 = vld [vmem:[%s413 + $0x118] sm:$0xff]
  %v450 = vld [vmem:[%s413 + $0x120] sm:$0x7]
  %v451 = vld [vmem:[%s413 + $0x128] sm:$0x7]
  %v452 = vld [vmem:[%s413 + $0x130] sm:$0x7]
  %v453 = vld [vmem:[%s413 + $0x138] sm:$0x7]
  %v455 = vsel %vm59, %v450, 0
  %v458 = vsel %vm59, %v451, 0
  %v461 = vsel %vm59, %v452, 0
  %v464 = vsel %vm59, %v453, 0
  %466 = vmatprep.subr.mxu0 %v415
  %467 = vmatpush1.msra.mxu0 %v414
  %468 = vmatprep.subr.mxu0 %v419
  %469 = vmatpush1.msra.mxu0 %v418
  %470 = vmatprep.subr.mxu0 %v423
  %471 = vmatpush1.msra.mxu0 %v422
  %472 = vmatprep.subr.mxu0 %v427
  %473 = vmatpush1.msra.mxu0 %v426
  %474 = vmatprep.subr.mxu0 %v431
  %475 = vmatpush1.msra.mxu0 %v430
  %476 = vmatprep.subr.mxu0 %v435
  %477 = vmatpush1.msra.mxu0 %v434
  %478 = vmatprep.subr.mxu0 %v439
  %479 = vmatpush1.msra.mxu0 %v438
  %480 = vmatprep.subr.mxu0 %v443
  %481 = vmatpush1.msra.mxu0 %v442
  %482 = vmatprep.subr.mxu0 %v447
  %483 = vmatpush1.msra.mxu0 %v446
  %484 = vmatprep.subr.mxu0 %v458
  %485 = vmatpush1.msra.mxu0 %v455
  %486 = vmatprep.subr.mxu0 0.0
  %487 = vmatpush1.msra.mxu0 0.0
  %488 = vmatprep.subr.mxu0 0.0
  %489 = vmatpush1.msra.mxu0 0.0
  %490 = vmatprep.subr.mxu0 0.0
  %491 = vmatpush1.msra.mxu0 0.0
  %492 = vmatprep.subr.mxu0 0.0
  %493 = vmatpush1.msra.mxu0 0.0
  %494 = vmatprep.subr.mxu0 0.0
  %495 = vmatpush1.msra.mxu0 0.0
  %496 = vmatprep.subr.mxu0 0.0
  %497 = vmatpush1.msra.mxu0 0.0
  %498 = vmatprep.subr.mxu0 0.0
  %499 = vmatpush1.msra.mxu0 0.0
  %500 = vmatprep.subr.mxu0 0.0
  %501 = vmatpush1.msra.mxu0 0.0
  %502 = vmatprep.subr.mxu0 0.0
  %503 = vmatpush1.msra.mxu0 0.0
  %504 = vmatprep.subr.mxu0 0.0
  %505 = vmatpush1.msra.mxu0 0.0
  %506 = vmatprep.subr.mxu0 0.0
  %507 = vmatpush1.msra.mxu0 0.0
  %508 = vmatprep.subr.mxu0 0.0
  %509 = vmatpush1.msra.mxu0 0.0
  %510 = vmatprep.subr.mxu0 0.0
  %511 = vmatpush1.msra.mxu0 0.0
  %512 = vmatprep.subr.mxu0 0.0
  %513 = vmatpush1.msra.mxu0 0.0
  %514 = vmatprep.subr.mxu0 0.0
  %515 = vmatpush1.msra.mxu0 0.0
  %516 = vmatprep.subr.mxu0 0.0
  %517 = vmatpush1.msra.mxu0 0.0
  %518 = vmatprep.subr.mxu0 0.0
  %519 = vmatpush1.msra.mxu0 0.0
  %520 = vmatprep.subr.mxu0 0.0
  %521 = vmatpush1.msra.mxu0 0.0
  %522 = vmatprep.subr.mxu0 0.0
  %523 = vmatpush1.msra.mxu0 0.0
  %524 = vmatprep.subr.mxu0 0.0
  %525 = vmatpush1.msra.mxu0 0.0
  %526 = vmatprep.subr.mxu0 0.0
  %527 = vmatpush1.msra.mxu0 0.0
  %528 = vmatprep.subr.mxu0 0.0
  %529 = vmatpush1.msra.mxu0 0.0
  %530 = vmatprep.mubr.f32.mxu0 0.0
  %531 = vmatmul.mubr.f32.gmra.mrb[0].mxu0 %v57
  %v532 = vpop.f32.mrb[0].mxu0
  %v533 = vadd.f32 0.0, %v532
  %v534 = vpop.f32.mrb[0].mxu0
  %v535 = vadd.f32 0.0, %v534
  %536 = vdwg.mxu0
  %537 = vmatprep.subr.mxu0 %v417
  %538 = vmatpush1.msra.mxu0 %v416
  %539 = vmatprep.subr.mxu0 %v421
  %540 = vmatpush1.msra.mxu0 %v420
  %541 = vmatprep.subr.mxu0 %v425
  %542 = vmatpush1.msra.mxu0 %v424
  %543 = vmatprep.subr.mxu0 %v429
  %544 = vmatpush1.msra.mxu0 %v428
  %545 = vmatprep.subr.mxu0 %v433
  %546 = vmatpush1.msra.mxu0 %v432
  %547 = vmatprep.subr.mxu0 %v437
  %548 = vmatpush1.msra.mxu0 %v436
  %549 = vmatprep.subr.mxu0 %v441
  %550 = vmatpush1.msra.mxu0 %v440
  %551 = vmatprep.subr.mxu0 %v445
  %552 = vmatpush1.msra.mxu0 %v444
  %553 = vmatprep.subr.mxu0 %v449
  %554 = vmatpush1.msra.mxu0 %v448
  %555 = vmatprep.subr.mxu0 %v464
  %556 = vmatpush1.msra.mxu0 %v461
  %557 = vmatprep.subr.mxu0 0.0
  %558 = vmatpush1.msra.mxu0 0.0
  %559 = vmatprep.subr.mxu0 0.0
  %560 = vmatpush1.msra.mxu0 0.0
  %561 = vmatprep.subr.mxu0 0.0
  %562 = vmatpush1.msra.mxu0 0.0
  %563 = vmatprep.subr.mxu0 0.0
  %564 = vmatpush1.msra.mxu0 0.0
  %565 = vmatprep.subr.mxu0 0.0
  %566 = vmatpush1.msra.mxu0 0.0
  %567 = vmatprep.subr.mxu0 0.0
  %568 = vmatpush1.msra.mxu0 0.0
  %569 = vmatprep.subr.mxu0 0.0
  %570 = vmatpush1.msra.mxu0 0.0
  %571 = vmatprep.subr.mxu0 0.0
  %572 = vmatpush1.msra.mxu0 0.0
  %573 = vmatprep.subr.mxu0 0.0
  %574 = vmatpush1.msra.mxu0 0.0
  %575 = vmatprep.subr.mxu0 0.0
  %576 = vmatpush1.msra.mxu0 0.0
  %577 = vmatprep.subr.mxu0 0.0
  %578 = vmatpush1.msra.mxu0 0.0
  %579 = vmatprep.subr.mxu0 0.0
  %580 = vmatpush1.msra.mxu0 0.0
  %581 = vmatprep.subr.mxu0 0.0
  %582 = vmatpush1.msra.mxu0 0.0
  %583 = vmatprep.subr.mxu0 0.0
  %584 = vmatpush1.msra.mxu0 0.0
  %585 = vmatprep.subr.mxu0 0.0
  %586 = vmatpush1.msra.mxu0 0.0
  %587 = vmatprep.subr.mxu0 0.0
  %588 = vmatpush1.msra.mxu0 0.0
  %589 = vmatprep.subr.mxu0 0.0
  %590 = vmatpush1.msra.mxu0 0.0
  %591 = vmatprep.subr.mxu0 0.0
  %592 = vmatpush1.msra.mxu0 0.0
  %593 = vmatprep.subr.mxu0 0.0
  %594 = vmatpush1.msra.mxu0 0.0
  %595 = vmatprep.subr.mxu0 0.0
  %596 = vmatpush1.msra.mxu0 0.0
  %597 = vmatprep.subr.mxu0 0.0
  %598 = vmatpush1.msra.mxu0 0.0
  %599 = vmatprep.subr.mxu0 0.0
  %600 = vmatpush1.msra.mxu0 0.0
  %601 = vmatprep.mubr.f32.mxu0 0.0
  %602 = vmatmul.mubr.f32.gmra.mrb[0].mxu0 %v57
  %v603 = vpop.f32.mrb[0].mxu0
  %v604 = vadd.f32 0.0, %v603
  %v605 = vpop.f32.mrb[0].mxu0
  %v606 = vadd.f32 0.0, %v605
  %607 = vdwg.mxu0
  %v608 = vmax.f32 %v409, %v533
  %v609 = vmax.f32 %v410, %v535
  %v610 = vmax.f32 %v411, %v604
  %v611 = vmax.f32 %v412, %v606
  %s612 = scalar_lea.vmem %s0, 960
  %v613 = vld [vmem:[%s612] sm:$0xff]
  %v614 = vld [vmem:[%s612 + $0x8] sm:$0xff]
  %v615 = vld [vmem:[%s612 + $0x10] sm:$0xff]
  %v616 = vld [vmem:[%s612 + $0x18] sm:$0xff]
  %v617 = vld [vmem:[%s612 + $0x20] sm:$0xff]
  %v618 = vld [vmem:[%s612 + $0x28] sm:$0xff]
  %v619 = vld [vmem:[%s612 + $0x30] sm:$0xff]
  %v620 = vld [vmem:[%s612 + $0x38] sm:$0xff]
  %v621 = vld [vmem:[%s612 + $0x40] sm:$0xff]
  %v622 = vld [vmem:[%s612 + $0x48] sm:$0xff]
  %v623 = vld [vmem:[%s612 + $0x50] sm:$0xff]
  %v624 = vld [vmem:[%s612 + $0x58] sm:$0xff]
  %v625 = vld [vmem:[%s612 + $0x60] sm:$0xff]
  %v626 = vld [vmem:[%s612 + $0x68] sm:$0xff]
  %v627 = vld [vmem:[%s612 + $0x70] sm:$0xff]
  %v628 = vld [vmem:[%s612 + $0x78] sm:$0xff]
  %v629 = vld [vmem:[%s612 + $0x80] sm:$0xff]
  %v630 = vld [vmem:[%s612 + $0x88] sm:$0xff]
  %v631 = vld [vmem:[%s612 + $0x90] sm:$0xff]
  %v632 = vld [vmem:[%s612 + $0x98] sm:$0xff]
  %v633 = vld [vmem:[%s612 + $0xa0] sm:$0xff]
  %v634 = vld [vmem:[%s612 + $0xa8] sm:$0xff]
  %v635 = vld [vmem:[%s612 + $0xb0] sm:$0xff]
  %v636 = vld [vmem:[%s612 + $0xb8] sm:$0xff]
  %v637 = vld [vmem:[%s612 + $0xc0] sm:$0xff]
  %v638 = vld [vmem:[%s612 + $0xc8] sm:$0xff]
  %v639 = vld [vmem:[%s612 + $0xd0] sm:$0xff]
  %v640 = vld [vmem:[%s612 + $0xd8] sm:$0xff]
  %v641 = vld [vmem:[%s612 + $0xe0] sm:$0xff]
  %v642 = vld [vmem:[%s612 + $0xe8] sm:$0xff]
  %v643 = vld [vmem:[%s612 + $0xf0] sm:$0xff]
  %v644 = vld [vmem:[%s612 + $0xf8] sm:$0xff]
  %v645 = vld [vmem:[%s612 + $0x100] sm:$0xff]
  %v646 = vld [vmem:[%s612 + $0x108] sm:$0xff]
  %v647 = vld [vmem:[%s612 + $0x110] sm:$0xff]
  %v648 = vld [vmem:[%s612 + $0x118] sm:$0xff]
  %v649 = vld [vmem:[%s612 + $0x120] sm:$0x7]
  %v650 = vld [vmem:[%s612 + $0x128] sm:$0x7]
  %v651 = vld [vmem:[%s612 + $0x130] sm:$0x7]
  %v652 = vld [vmem:[%s612 + $0x138] sm:$0x7]
  %v654 = vsel %vm59, %v649, 0
  %v657 = vsel %vm59, %v650, 0
  %v660 = vsel %vm59, %v651, 0
  %v663 = vsel %vm59, %v652, 0
  %665 = vmatprep.subr.mxu0 %v614
  %666 = vmatpush1.msra.mxu0 %v613
  %667 = vmatprep.subr.mxu0 %v618
  %668 = vmatpush1.msra.mxu0 %v617
  %669 = vmatprep.subr.mxu0 %v622
  %670 = vmatpush1.msra.mxu0 %v621
  %671 = vmatprep.subr.mxu0 %v626
  %672 = vmatpush1.msra.mxu0 %v625
  %673 = vmatprep.subr.mxu0 %v630
  %674 = vmatpush1.msra.mxu0 %v629
  %675 = vmatprep.subr.mxu0 %v634
  %676 = vmatpush1.msra.mxu0 %v633
  %677 = vmatprep.subr.mxu0 %v638
  %678 = vmatpush1.msra.mxu0 %v637
  %679 = vmatprep.subr.mxu0 %v642
  %680 = vmatpush1.msra.mxu0 %v641
  %681 = vmatprep.subr.mxu0 %v646
  %682 = vmatpush1.msra.mxu0 %v645
  %683 = vmatprep.subr.mxu0 %v657
  %684 = vmatpush1.msra.mxu0 %v654
  %685 = vmatprep.subr.mxu0 0.0
  %686 = vmatpush1.msra.mxu0 0.0
  %687 = vmatprep.subr.mxu0 0.0
  %688 = vmatpush1.msra.mxu0 0.0
  %689 = vmatprep.subr.mxu0 0.0
  %690 = vmatpush1.msra.mxu0 0.0
  %691 = vmatprep.subr.mxu0 0.0
  %692 = vmatpush1.msra.mxu0 0.0
  %693 = vmatprep.subr.mxu0 0.0
  %694 = vmatpush1.msra.mxu0 0.0
  %695 = vmatprep.subr.mxu0 0.0
  %696 = vmatpush1.msra.mxu0 0.0
  %697 = vmatprep.subr.mxu0 0.0
  %698 = vmatpush1.msra.mxu0 0.0
  %699 = vmatprep.subr.mxu0 0.0
  %700 = vmatpush1.msra.mxu0 0.0
  %701 = vmatprep.subr.mxu0 0.0
  %702 = vmatpush1.msra.mxu0 0.0
  %703 = vmatprep.subr.mxu0 0.0
  %704 = vmatpush1.msra.mxu0 0.0
  %705 = vmatprep.subr.mxu0 0.0
  %706 = vmatpush1.msra.mxu0 0.0
  %707 = vmatprep.subr.mxu0 0.0
  %708 = vmatpush1.msra.mxu0 0.0
  %709 = vmatprep.subr.mxu0 0.0
  %710 = vmatpush1.msra.mxu0 0.0
  %711 = vmatprep.subr.mxu0 0.0
  %712 = vmatpush1.msra.mxu0 0.0
  %713 = vmatprep.subr.mxu0 0.0
  %714 = vmatpush1.msra.mxu0 0.0
  %715 = vmatprep.subr.mxu0 0.0
  %716 = vmatpush1.msra.mxu0 0.0
  %717 = vmatprep.subr.mxu0 0.0
  %718 = vmatpush1.msra.mxu0 0.0
  %719 = vmatprep.subr.mxu0 0.0
  %720 = vmatpush1.msra.mxu0 0.0
  %721 = vmatprep.subr.mxu0 0.0
  %722 = vmatpush1.msra.mxu0 0.0
  %723 = vmatprep.subr.mxu0 0.0
  %724 = vmatpush1.msra.mxu0 0.0
  %725 = vmatprep.subr.mxu0 0.0
  %726 = vmatpush1.msra.mxu0 0.0
  %727 = vmatprep.subr.mxu0 0.0
  %728 = vmatpush1.msra.mxu0 0.0
  %729 = vmatprep.mubr.f32.mxu0 0.0
  %730 = vmatmul.mubr.f32.gmra.mrb[0].mxu0 %v57
  %v731 = vpop.f32.mrb[0].mxu0
  %v732 = vadd.f32 0.0, %v731
  %v733 = vpop.f32.mrb[0].mxu0
  %v734 = vadd.f32 0.0, %v733
  %735 = vdwg.mxu0
  %736 = vmatprep.subr.mxu0 %v616
  %737 = vmatpush1.msra.mxu0 %v615
  %738 = vmatprep.subr.mxu0 %v620
  %739 = vmatpush1.msra.mxu0 %v619
  %740 = vmatprep.subr.mxu0 %v624
  %741 = vmatpush1.msra.mxu0 %v623
  %742 = vmatprep.subr.mxu0 %v628
  %743 = vmatpush1.msra.mxu0 %v627
  %744 = vmatprep.subr.mxu0 %v632
  %745 = vmatpush1.msra.mxu0 %v631
  %746 = vmatprep.subr.mxu0 %v636
  %747 = vmatpush1.msra.mxu0 %v635
  %748 = vmatprep.subr.mxu0 %v640
  %749 = vmatpush1.msra.mxu0 %v639
  %750 = vmatprep.subr.mxu0 %v644
  %751 = vmatpush1.msra.mxu0 %v643
  %752 = vmatprep.subr.mxu0 %v648
  %753 = vmatpush1.msra.mxu0 %v647
  %754 = vmatprep.subr.mxu0 %v663
  %755 = vmatpush1.msra.mxu0 %v660
  %756 = vmatprep.subr.mxu0 0.0
  %757 = vmatpush1.msra.mxu0 0.0
  %758 = vmatprep.subr.mxu0 0.0
  %759 = vmatpush1.msra.mxu0 0.0
  %760 = vmatprep.subr.mxu0 0.0
  %761 = vmatpush1.msra.mxu0 0.0
  %762 = vmatprep.subr.mxu0 0.0
  %763 = vmatpush1.msra.mxu0 0.0
  %764 = vmatprep.subr.mxu0 0.0
  %765 = vmatpush1.msra.mxu0 0.0
  %766 = vmatprep.subr.mxu0 0.0
  %767 = vmatpush1.msra.mxu0 0.0
  %768 = vmatprep.subr.mxu0 0.0
  %769 = vmatpush1.msra.mxu0 0.0
  %770 = vmatprep.subr.mxu0 0.0
  %771 = vmatpush1.msra.mxu0 0.0
  %772 = vmatprep.subr.mxu0 0.0
  %773 = vmatpush1.msra.mxu0 0.0
  %774 = vmatprep.subr.mxu0 0.0
  %775 = vmatpush1.msra.mxu0 0.0
  %776 = vmatprep.subr.mxu0 0.0
  %777 = vmatpush1.msra.mxu0 0.0
  %778 = vmatprep.subr.mxu0 0.0
  %779 = vmatpush1.msra.mxu0 0.0
  %780 = vmatprep.subr.mxu0 0.0
  %781 = vmatpush1.msra.mxu0 0.0
  %782 = vmatprep.subr.mxu0 0.0
  %783 = vmatpush1.msra.mxu0 0.0
  %784 = vmatprep.subr.mxu0 0.0
  %785 = vmatpush1.msra.mxu0 0.0
  %786 = vmatprep.subr.mxu0 0.0
  %787 = vmatpush1.msra.mxu0 0.0
  %788 = vmatprep.subr.mxu0 0.0
  %789 = vmatpush1.msra.mxu0 0.0
  %790 = vmatprep.subr.mxu0 0.0
  %791 = vmatpush1.msra.mxu0 0.0
  %792 = vmatprep.subr.mxu0 0.0
  %793 = vmatpush1.msra.mxu0 0.0
  %794 = vmatprep.subr.mxu0 0.0
  %795 = vmatpush1.msra.mxu0 0.0
  %796 = vmatprep.subr.mxu0 0.0
  %797 = vmatpush1.msra.mxu0 0.0
  %798 = vmatprep.subr.mxu0 0.0
  %799 = vmatpush1.msra.mxu0 0.0
  %800 = vmatprep.mubr.f32.mxu0 0.0
  %801 = vmatmul.mubr.f32.gmra.mrb[0].mxu0 %v57
  %v802 = vpop.f32.mrb[0].mxu0
  %v803 = vadd.f32 0.0, %v802
  %v804 = vpop.f32.mrb[0].mxu0
  %v805 = vadd.f32 0.0, %v804
  %806 = vdwg.mxu0
  %v807 = vmax.f32 %v608, %v732
  %v808 = vmax.f32 %v609, %v734
  %v809 = vmax.f32 %v610, %v803
  %v810 = vmax.f32 %v611, %v805
  %v811 = vld [vmem:[%s2] sm:$0x3f]
  %813 = vset.pattern.permute.xlu0 0
  %814 = vperm.xlu0 %813, %v811
  %v815 = vpop.permute.xlu0 %814
  %v817 = vadd.f32 %v807, %v815
  %v818 = vadd.f32 %v808, %v815
  %v819 = vadd.f32 %v809, %v815
  %v820 = vadd.f32 %v810, %v815
  %v821 = vmax.f32 %v817, 0.0
  %v822 = vmax.f32 %v818, 0.0
  %v823 = vmax.f32 %v819, 0.0
  %v824 = vmax.f32 %v820, 0.0
  %825 = vst [vmem:[%s3] sm:$0x3f] %v821
  %826 = vst [vmem:[%s3 + $0x8] sm:$0x3f] %v822
  %827 = vst [vmem:[%s3 + $0x10] sm:$0x3f] %v823
  %vm828 = vcmask 62464
  %829 = vst.msk [vmem:[%s3 + $0x18] sm:$0x3f] %vm828, %v824
  // Predicated region
  $region14: #{net_forward.3} parent=0 // pred_check
    _
  $region15: #{net_forward.3} parent=0 // pred_check_branch
    %831 = sbr.rel (0) target = $region17
  $region16: #{net_forward.3} parent=0 // pred_region
    _
  $region17: #{net_forward.3} parent=0 // pred_fallthru
    _
  // Predicated region
  $region18: #{net_forward.3} parent=0 // pred_check
    _
  $region19: #{net_forward.3} parent=0 // pred_check_branch
    %833 = sbr.rel (0) target = $region21
  $region20: #{net_forward.3} parent=0 // pred_region
    _
  $region21: #{net_forward.3} parent=0 // pred_fallthru
    _

// kernel: net_forward.4
$region0: #{net_forward.4}
  #allocation0 [shape = 'u32[]', space=smem, size = 0x4, offset = 0x4, fixed_abs, tag = 'smem constant byte address 0x4 - core index']
  #allocation1 [shape = 'u32[144,128]{1,0:T(1,128)}', space=vmem, size = 0x12000, scoped, tag = 'internal scratch']
  %s0 = inlined_call_operand.vmem [shape: f32[4,150,50], index: 0, kind: input, shape index: {}]
  %s1 = inlined_call_operand.vmem [shape: f32[16,150], index: 1, kind: input, shape index: {}]
  %s2 = inlined_call_operand.vmem [shape: f32[16,1], index: 2, kind: input, shape index: {}]
  %s3 = inlined_call_operand.vmem [shape: f32[16,50], index: 3, kind: output, shape index: {}]
  %s4 = sld [smem:[#allocation0]]
  $region22: #{net_forward.4} parent=0
    _
  %s6 = ssub.s32 1, %s4
  %s7 = scalar_select 0, %s6, %s4
  // Predicated region
  $region2: #{net_forward.4} parent=0 // pred_check
    _
  $region3: #{net_forward.4} parent=0 // pred_check_branch
    %9 = sbr.rel (0) target = $region5
  $region4: #{net_forward.4} parent=0 // pred_region
    _
  $region5: #{net_forward.4} parent=0 // pred_fallthru
    _
  // Predicated region
  $region6: #{net_forward.4} parent=0 // pred_check
    _
  $region7: #{net_forward.4} parent=0 // pred_check_branch
    %11 = sbr.rel (0) target = $region9
  $region8: #{net_forward.4} parent=0 // pred_region
    _
  $region9: #{net_forward.4} parent=0 // pred_fallthru
    _
  // Predicated region
  $region10: #{net_forward.4} parent=0 // pred_check
    _
  $region11: #{net_forward.4} parent=0 // pred_check_branch
    %13 = sbr.rel (0) target = $region13
  $region12: #{net_forward.4} parent=0 // pred_region
    _
  $region13: #{net_forward.4} parent=0 // pred_fallthru
    _
  %v14 = vld [vmem:[%s1] sm:$0xff]
  %v15 = vld [vmem:[%s1 + $0x8] sm:$0xff]
  %v16 = vld [vmem:[%s1 + $0x10] sm:$0xff]
  %v17 = vld [vmem:[%s1 + $0x18] sm:$0xff]
  %v18 = vld [vmem:[%s0] sm:$0xff]
  %v19 = vld [vmem:[%s0 + $0x8] sm:$0xff]
  %v20 = vld [vmem:[%s0 + $0x10] sm:$0xff]
  %v21 = vld [vmem:[%s0 + $0x18] sm:$0xff]
  %v22 = vld [vmem:[%s0 + $0x20] sm:$0xff]
  %v23 = vld [vmem:[%s0 + $0x28] sm:$0xff]
  %v24 = vld [vmem:[%s0 + $0x30] sm:$0xff]
  %v25 = vld [vmem:[%s0 + $0x38] sm:$0xff]
  %v26 = vld [vmem:[%s0 + $0x40] sm:$0xff]
  %v27 = vld [vmem:[%s0 + $0x48] sm:$0xff]
  %v28 = vld [vmem:[%s0 + $0x50] sm:$0xff]
  %v29 = vld [vmem:[%s0 + $0x58] sm:$0xff]
  %v30 = vld [vmem:[%s0 + $0x60] sm:$0xff]
  %v31 = vld [vmem:[%s0 + $0x68] sm:$0xff]
  %v32 = vld [vmem:[%s0 + $0x70] sm:$0xff]
  %v33 = vld [vmem:[%s0 + $0x78] sm:$0xff]
  %v34 = vld [vmem:[%s0 + $0x80] sm:$0xff]
  %v35 = vld [vmem:[%s0 + $0x88] sm:$0xff]
  %v36 = vld [vmem:[%s0 + $0x90] sm:$0x3f]
  %vm37 = vcmask 179200
  %v39 = vsel %vm37, %v15, 0
  %v42 = vsel %vm37, %v17, 0
  %vm44 = vcmask 1045504
  %v46 = vsel %vm44, %v36, 0
  %48 = vmatprep.subr.mxu0 0.0
  %49 = vmatpush1.msra.mxu0 %v18
  %50 = vmatprep.subr.mxu0 0.0
  %51 = vmatpush1.msra.mxu0 %v19
  %52 = vmatprep.subr.mxu0 0.0
  %53 = vmatpush1.msra.mxu0 %v20
  %54 = vmatprep.subr.mxu0 0.0
  %55 = vmatpush1.msra.mxu0 %v21
  %56 = vmatprep.subr.mxu0 0.0
  %57 = vmatpush1.msra.mxu0 %v22
  %58 = vmatprep.subr.mxu0 0.0
  %59 = vmatpush1.msra.mxu0 %v23
  %60 = vmatprep.subr.mxu0 0.0
  %61 = vmatpush1.msra.mxu0 %v24
  %62 = vmatprep.subr.mxu0 0.0
  %63 = vmatpush1.msra.mxu0 %v25
  %64 = vmatprep.subr.mxu0 0.0
  %65 = vmatpush1.msra.mxu0 %v26
  %66 = vmatprep.subr.mxu0 0.0
  %67 = vmatpush1.msra.mxu0 %v27
  %68 = vmatprep.subr.mxu0 0.0
  %69 = vmatpush1.msra.mxu0 %v28
  %70 = vmatprep.subr.mxu0 0.0
  %71 = vmatpush1.msra.mxu0 %v29
  %72 = vmatprep.subr.mxu0 0.0
  %73 = vmatpush1.msra.mxu0 %v30
  %74 = vmatprep.subr.mxu0 0.0
  %75 = vmatpush1.msra.mxu0 %v31
  %76 = vmatprep.subr.mxu0 0.0
  %77 = vmatpush1.msra.mxu0 %v32
  %78 = vmatprep.subr.mxu0 0.0
  %79 = vmatpush1.msra.mxu0 %v33
  %80 = vmatprep.subr.mxu0 0.0
  %81 = vmatpush1.msra.mxu0 %v34
  %82 = vmatprep.subr.mxu0 0.0
  %83 = vmatpush1.msra.mxu0 %v35
  %84 = vmatprep.subr.mxu0 0.0
  %85 = vmatpush1.msra.mxu0 %v46
  %86 = vmatprep.subr.mxu0 0.0
  %87 = vmatpush1.msra.mxu0 0.0
  %88 = vmatprep.subr.mxu0 0.0
  %89 = vmatpush1.msra.mxu0 0.0
  %90 = vmatprep.subr.mxu0 0.0
  %91 = vmatpush1.msra.mxu0 0.0
  %92 = vmatprep.subr.mxu0 0.0
  %93 = vmatpush1.msra.mxu0 0.0
  %94 = vmatprep.subr.mxu0 0.0
  %95 = vmatpush1.msra.mxu0 0.0
  %96 = vmatprep.subr.mxu0 0.0
  %97 = vmatpush1.msra.mxu0 0.0
  %98 = vmatprep.subr.mxu0 0.0
  %99 = vmatpush1.msra.mxu0 0.0
  %100 = vmatprep.subr.mxu0 0.0
  %101 = vmatpush1.msra.mxu0 0.0
  %102 = vmatprep.subr.mxu0 0.0
  %103 = vmatpush1.msra.mxu0 0.0
  %104 = vmatprep.subr.mxu0 0.0
  %105 = vmatpush1.msra.mxu0 0.0
  %106 = vmatprep.subr.mxu0 0.0
  %107 = vmatpush1.msra.mxu0 0.0
  %108 = vmatprep.subr.mxu0 0.0
  %109 = vmatpush1.msra.mxu0 0.0
  %110 = vmatprep.subr.mxu0 0.0
  %111 = vmatpush1.msra.mxu0 0.0
  %112 = vmatprep.mubr.f32.mxu0 %v39
  %113 = vmatmul.mubr.f32.gmra.mrb[0].mxu0 %v14
  %v114 = vpop.f32.mrb[0].mxu0
  %v115 = vadd.f32 0.0, %v114
  %v116 = vpop.f32.mrb[0].mxu0
  %117 = vmatprep.mubr.f32.mxu0 %v42
  %118 = vmatmul.mubr.f32.gmra.mrb[0].mxu0 %v16
  %v119 = vpop.f32.mrb[0].mxu0
  %v120 = vadd.f32 0.0, %v119
  %v121 = vpop.f32.mrb[0].mxu0
  %122 = vdwg.mxu0
  %s123 = scalar_lea.vmem %s0, 152
  %v124 = vld [vmem:[%s123] sm:$0xff]
  %v125 = vld [vmem:[%s123 + $0x8] sm:$0xff]
  %v126 = vld [vmem:[%s123 + $0x10] sm:$0xff]
  %v127 = vld [vmem:[%s123 + $0x18] sm:$0xff]
  %v128 = vld [vmem:[%s123 + $0x20] sm:$0xff]
  %v129 = vld [vmem:[%s123 + $0x28] sm:$0xff]
  %v130 = vld [vmem:[%s123 + $0x30] sm:$0xff]
  %v131 = vld [vmem:[%s123 + $0x38] sm:$0xff]
  %v132 = vld [vmem:[%s123 + $0x40] sm:$0xff]
  %v133 = vld [vmem:[%s123 + $0x48] sm:$0xff]
  %v134 = vld [vmem:[%s123 + $0x50] sm:$0xff]
  %v135 = vld [vmem:[%s123 + $0x58] sm:$0xff]
  %v136 = vld [vmem:[%s123 + $0x60] sm:$0xff]
  %v137 = vld [vmem:[%s123 + $0x68] sm:$0xff]
  %v138 = vld [vmem:[%s123 + $0x70] sm:$0xff]
  %v139 = vld [vmem:[%s123 + $0x78] sm:$0xff]
  %v140 = vld [vmem:[%s123 + $0x80] sm:$0xff]
  %v141 = vld [vmem:[%s123 + $0x88] sm:$0xff]
  %v142 = vld [vmem:[%s123 + $0x90] sm:$0x3f]
  %v144 = vsel %vm44, %v142, 0
  %146 = vmatprep.subr.mxu0 0.0
  %147 = vmatpush1.msra.mxu0 %v124
  %148 = vmatprep.subr.mxu0 0.0
  %149 = vmatpush1.msra.mxu0 %v125
  %150 = vmatprep.subr.mxu0 0.0
  %151 = vmatpush1.msra.mxu0 %v126
  %152 = vmatprep.subr.mxu0 0.0
  %153 = vmatpush1.msra.mxu0 %v127
  %154 = vmatprep.subr.mxu0 0.0
  %155 = vmatpush1.msra.mxu0 %v128
  %156 = vmatprep.subr.mxu0 0.0
  %157 = vmatpush1.msra.mxu0 %v129
  %158 = vmatprep.subr.mxu0 0.0
  %159 = vmatpush1.msra.mxu0 %v130
  %160 = vmatprep.subr.mxu0 0.0
  %161 = vmatpush1.msra.mxu0 %v131
  %162 = vmatprep.subr.mxu0 0.0
  %163 = vmatpush1.msra.mxu0 %v132
  %164 = vmatprep.subr.mxu0 0.0
  %165 = vmatpush1.msra.mxu0 %v133
  %166 = vmatprep.subr.mxu0 0.0
  %167 = vmatpush1.msra.mxu0 %v134
  %168 = vmatprep.subr.mxu0 0.0
  %169 = vmatpush1.msra.mxu0 %v135
  %170 = vmatprep.subr.mxu0 0.0
  %171 = vmatpush1.msra.mxu0 %v136
  %172 = vmatprep.subr.mxu0 0.0
  %173 = vmatpush1.msra.mxu0 %v137
  %174 = vmatprep.subr.mxu0 0.0
  %175 = vmatpush1.msra.mxu0 %v138
  %176 = vmatprep.subr.mxu0 0.0
  %177 = vmatpush1.msra.mxu0 %v139
  %178 = vmatprep.subr.mxu0 0.0
  %179 = vmatpush1.msra.mxu0 %v140
  %180 = vmatprep.subr.mxu0 0.0
  %181 = vmatpush1.msra.mxu0 %v141
  %182 = vmatprep.subr.mxu0 0.0
  %183 = vmatpush1.msra.mxu0 %v144
  %184 = vmatprep.subr.mxu0 0.0
  %185 = vmatpush1.msra.mxu0 0.0
  %186 = vmatprep.subr.mxu0 0.0
  %187 = vmatpush1.msra.mxu0 0.0
  %188 = vmatprep.subr.mxu0 0.0
  %189 = vmatpush1.msra.mxu0 0.0
  %190 = vmatprep.subr.mxu0 0.0
  %191 = vmatpush1.msra.mxu0 0.0
  %192 = vmatprep.subr.mxu0 0.0
  %193 = vmatpush1.msra.mxu0 0.0
  %194 = vmatprep.subr.mxu0 0.0
  %195 = vmatpush1.msra.mxu0 0.0
  %196 = vmatprep.subr.mxu0 0.0
  %197 = vmatpush1.msra.mxu0 0.0
  %198 = vmatprep.subr.mxu0 0.0
  %199 = vmatpush1.msra.mxu0 0.0
  %200 = vmatprep.subr.mxu0 0.0
  %201 = vmatpush1.msra.mxu0 0.0
  %202 = vmatprep.subr.mxu0 0.0
  %203 = vmatpush1.msra.mxu0 0.0
  %204 = vmatprep.subr.mxu0 0.0
  %205 = vmatpush1.msra.mxu0 0.0
  %206 = vmatprep.subr.mxu0 0.0
  %207 = vmatpush1.msra.mxu0 0.0
  %208 = vmatprep.subr.mxu0 0.0
  %209 = vmatpush1.msra.mxu0 0.0
  %210 = vmatprep.mubr.f32.mxu0 %v39
  %211 = vmatmul.mubr.f32.gmra.mrb[0].mxu0 %v14
  %v212 = vpop.f32.mrb[0].mxu0
  %v213 = vadd.f32 0.0, %v212
  %v214 = vpop.f32.mrb[0].mxu0
  %215 = vmatprep.mubr.f32.mxu0 %v42
  %216 = vmatmul.mubr.f32.gmra.mrb[0].mxu0 %v16
  %v217 = vpop.f32.mrb[0].mxu0
  %v218 = vadd.f32 0.0, %v217
  %v219 = vpop.f32.mrb[0].mxu0
  %220 = vdwg.mxu0
  %v221 = vmax.f32 %v115, %v213
  %v222 = vmax.f32 %v120, %v218
  %s223 = scalar_lea.vmem %s0, 304
  %v224 = vld [vmem:[%s223] sm:$0xff]
  %v225 = vld [vmem:[%s223 + $0x8] sm:$0xff]
  %v226 = vld [vmem:[%s223 + $0x10] sm:$0xff]
  %v227 = vld [vmem:[%s223 + $0x18] sm:$0xff]
  %v228 = vld [vmem:[%s223 + $0x20] sm:$0xff]
  %v229 = vld [vmem:[%s223 + $0x28] sm:$0xff]
  %v230 = vld [vmem:[%s223 + $0x30] sm:$0xff]
  %v231 = vld [vmem:[%s223 + $0x38] sm:$0xff]
  %v232 = vld [vmem:[%s223 + $0x40] sm:$0xff]
  %v233 = vld [vmem:[%s223 + $0x48] sm:$0xff]
  %v234 = vld [vmem:[%s223 + $0x50] sm:$0xff]
  %v235 = vld [vmem:[%s223 + $0x58] sm:$0xff]
  %v236 = vld [vmem:[%s223 + $0x60] sm:$0xff]
  %v237 = vld [vmem:[%s223 + $0x68] sm:$0xff]
  %v238 = vld [vmem:[%s223 + $0x70] sm:$0xff]
  %v239 = vld [vmem:[%s223 + $0x78] sm:$0xff]
  %v240 = vld [vmem:[%s223 + $0x80] sm:$0xff]
  %v241 = vld [vmem:[%s223 + $0x88] sm:$0xff]
  %v242 = vld [vmem:[%s223 + $0x90] sm:$0x3f]
  %v244 = vsel %vm44, %v242, 0
  %246 = vmatprep.subr.mxu0 0.0
  %247 = vmatpush1.msra.mxu0 %v224
  %248 = vmatprep.subr.mxu0 0.0
  %249 = vmatpush1.msra.mxu0 %v225
  %250 = vmatprep.subr.mxu0 0.0
  %251 = vmatpush1.msra.mxu0 %v226
  %252 = vmatprep.subr.mxu0 0.0
  %253 = vmatpush1.msra.mxu0 %v227
  %254 = vmatprep.subr.mxu0 0.0
  %255 = vmatpush1.msra.mxu0 %v228
  %256 = vmatprep.subr.mxu0 0.0
  %257 = vmatpush1.msra.mxu0 %v229
  %258 = vmatprep.subr.mxu0 0.0
  %259 = vmatpush1.msra.mxu0 %v230
  %260 = vmatprep.subr.mxu0 0.0
  %261 = vmatpush1.msra.mxu0 %v231
  %262 = vmatprep.subr.mxu0 0.0
  %263 = vmatpush1.msra.mxu0 %v232
  %264 = vmatprep.subr.mxu0 0.0
  %265 = vmatpush1.msra.mxu0 %v233
  %266 = vmatprep.subr.mxu0 0.0
  %267 = vmatpush1.msra.mxu0 %v234
  %268 = vmatprep.subr.mxu0 0.0
  %269 = vmatpush1.msra.mxu0 %v235
  %270 = vmatprep.subr.mxu0 0.0
  %271 = vmatpush1.msra.mxu0 %v236
  %272 = vmatprep.subr.mxu0 0.0
  %273 = vmatpush1.msra.mxu0 %v237
  %274 = vmatprep.subr.mxu0 0.0
  %275 = vmatpush1.msra.mxu0 %v238
  %276 = vmatprep.subr.mxu0 0.0
  %277 = vmatpush1.msra.mxu0 %v239
  %278 = vmatprep.subr.mxu0 0.0
  %279 = vmatpush1.msra.mxu0 %v240
  %280 = vmatprep.subr.mxu0 0.0
  %281 = vmatpush1.msra.mxu0 %v241
  %282 = vmatprep.subr.mxu0 0.0
  %283 = vmatpush1.msra.mxu0 %v244
  %284 = vmatprep.subr.mxu0 0.0
  %285 = vmatpush1.msra.mxu0 0.0
  %286 = vmatprep.subr.mxu0 0.0
  %287 = vmatpush1.msra.mxu0 0.0
  %288 = vmatprep.subr.mxu0 0.0
  %289 = vmatpush1.msra.mxu0 0.0
  %290 = vmatprep.subr.mxu0 0.0
  %291 = vmatpush1.msra.mxu0 0.0
  %292 = vmatprep.subr.mxu0 0.0
  %293 = vmatpush1.msra.mxu0 0.0
  %294 = vmatprep.subr.mxu0 0.0
  %295 = vmatpush1.msra.mxu0 0.0
  %296 = vmatprep.subr.mxu0 0.0
  %297 = vmatpush1.msra.mxu0 0.0
  %298 = vmatprep.subr.mxu0 0.0
  %299 = vmatpush1.msra.mxu0 0.0
  %300 = vmatprep.subr.mxu0 0.0
  %301 = vmatpush1.msra.mxu0 0.0
  %302 = vmatprep.subr.mxu0 0.0
  %303 = vmatpush1.msra.mxu0 0.0
  %304 = vmatprep.subr.mxu0 0.0
  %305 = vmatpush1.msra.mxu0 0.0
  %306 = vmatprep.subr.mxu0 0.0
  %307 = vmatpush1.msra.mxu0 0.0
  %308 = vmatprep.subr.mxu0 0.0
  %309 = vmatpush1.msra.mxu0 0.0
  %310 = vmatprep.mubr.f32.mxu0 %v39
  %311 = vmatmul.mubr.f32.gmra.mrb[0].mxu0 %v14
  %v312 = vpop.f32.mrb[0].mxu0
  %v313 = vadd.f32 0.0, %v312
  %v314 = vpop.f32.mrb[0].mxu0
  %315 = vmatprep.mubr.f32.mxu0 %v42
  %316 = vmatmul.mubr.f32.gmra.mrb[0].mxu0 %v16
  %v317 = vpop.f32.mrb[0].mxu0
  %v318 = vadd.f32 0.0, %v317
  %v319 = vpop.f32.mrb[0].mxu0
  %320 = vdwg.mxu0
  %v321 = vmax.f32 %v221, %v313
  %v322 = vmax.f32 %v222, %v318
  %s323 = scalar_lea.vmem %s0, 456
  %v324 = vld [vmem:[%s323] sm:$0xff]
  %v325 = vld [vmem:[%s323 + $0x8] sm:$0xff]
  %v326 = vld [vmem:[%s323 + $0x10] sm:$0xff]
  %v327 = vld [vmem:[%s323 + $0x18] sm:$0xff]
  %v328 = vld [vmem:[%s323 + $0x20] sm:$0xff]
  %v329 = vld [vmem:[%s323 + $0x28] sm:$0xff]
  %v330 = vld [vmem:[%s323 + $0x30] sm:$0xff]
  %v331 = vld [vmem:[%s323 + $0x38] sm:$0xff]
  %v332 = vld [vmem:[%s323 + $0x40] sm:$0xff]
  %v333 = vld [vmem:[%s323 + $0x48] sm:$0xff]
  %v334 = vld [vmem:[%s323 + $0x50] sm:$0xff]
  %v335 = vld [vmem:[%s323 + $0x58] sm:$0xff]
  %v336 = vld [vmem:[%s323 + $0x60] sm:$0xff]
  %v337 = vld [vmem:[%s323 + $0x68] sm:$0xff]
  %v338 = vld [vmem:[%s323 + $0x70] sm:$0xff]
  %v339 = vld [vmem:[%s323 + $0x78] sm:$0xff]
  %v340 = vld [vmem:[%s323 + $0x80] sm:$0xff]
  %v341 = vld [vmem:[%s323 + $0x88] sm:$0xff]
  %v342 = vld [vmem:[%s323 + $0x90] sm:$0x3f]
  %v344 = vsel %vm44, %v342, 0
  %346 = vmatprep.subr.mxu0 0.0
  %347 = vmatpush1.msra.mxu0 %v324
  %348 = vmatprep.subr.mxu0 0.0
  %349 = vmatpush1.msra.mxu0 %v325
  %350 = vmatprep.subr.mxu0 0.0
  %351 = vmatpush1.msra.mxu0 %v326
  %352 = vmatprep.subr.mxu0 0.0
  %353 = vmatpush1.msra.mxu0 %v327
  %354 = vmatprep.subr.mxu0 0.0
  %355 = vmatpush1.msra.mxu0 %v328
  %356 = vmatprep.subr.mxu0 0.0
  %357 = vmatpush1.msra.mxu0 %v329
  %358 = vmatprep.subr.mxu0 0.0
  %359 = vmatpush1.msra.mxu0 %v330
  %360 = vmatprep.subr.mxu0 0.0
  %361 = vmatpush1.msra.mxu0 %v331
  %362 = vmatprep.subr.mxu0 0.0
  %363 = vmatpush1.msra.mxu0 %v332
  %364 = vmatprep.subr.mxu0 0.0
  %365 = vmatpush1.msra.mxu0 %v333
  %366 = vmatprep.subr.mxu0 0.0
  %367 = vmatpush1.msra.mxu0 %v334
  %368 = vmatprep.subr.mxu0 0.0
  %369 = vmatpush1.msra.mxu0 %v335
  %370 = vmatprep.subr.mxu0 0.0
  %371 = vmatpush1.msra.mxu0 %v336
  %372 = vmatprep.subr.mxu0 0.0
  %373 = vmatpush1.msra.mxu0 %v337
  %374 = vmatprep.subr.mxu0 0.0
  %375 = vmatpush1.msra.mxu0 %v338
  %376 = vmatprep.subr.mxu0 0.0
  %377 = vmatpush1.msra.mxu0 %v339
  %378 = vmatprep.subr.mxu0 0.0
  %379 = vmatpush1.msra.mxu0 %v340
  %380 = vmatprep.subr.mxu0 0.0
  %381 = vmatpush1.msra.mxu0 %v341
  %382 = vmatprep.subr.mxu0 0.0
  %383 = vmatpush1.msra.mxu0 %v344
  %384 = vmatprep.subr.mxu0 0.0
  %385 = vmatpush1.msra.mxu0 0.0
  %386 = vmatprep.subr.mxu0 0.0
  %387 = vmatpush1.msra.mxu0 0.0
  %388 = vmatprep.subr.mxu0 0.0
  %389 = vmatpush1.msra.mxu0 0.0
  %390 = vmatprep.subr.mxu0 0.0
  %391 = vmatpush1.msra.mxu0 0.0
  %392 = vmatprep.subr.mxu0 0.0
  %393 = vmatpush1.msra.mxu0 0.0
  %394 = vmatprep.subr.mxu0 0.0
  %395 = vmatpush1.msra.mxu0 0.0
  %396 = vmatprep.subr.mxu0 0.0
  %397 = vmatpush1.msra.mxu0 0.0
  %398 = vmatprep.subr.mxu0 0.0
  %399 = vmatpush1.msra.mxu0 0.0
  %400 = vmatprep.subr.mxu0 0.0
  %401 = vmatpush1.msra.mxu0 0.0
  %402 = vmatprep.subr.mxu0 0.0
  %403 = vmatpush1.msra.mxu0 0.0
  %404 = vmatprep.subr.mxu0 0.0
  %405 = vmatpush1.msra.mxu0 0.0
  %406 = vmatprep.subr.mxu0 0.0
  %407 = vmatpush1.msra.mxu0 0.0
  %408 = vmatprep.subr.mxu0 0.0
  %409 = vmatpush1.msra.mxu0 0.0
  %410 = vmatprep.mubr.f32.mxu0 %v39
  %411 = vmatmul.mubr.f32.gmra.mrb[0].mxu0 %v14
  %v412 = vpop.f32.mrb[0].mxu0
  %v413 = vadd.f32 0.0, %v412
  %v414 = vpop.f32.mrb[0].mxu0
  %415 = vmatprep.mubr.f32.mxu0 %v42
  %416 = vmatmul.mubr.f32.gmra.mrb[0].mxu0 %v16
  %v417 = vpop.f32.mrb[0].mxu0
  %v418 = vadd.f32 0.0, %v417
  %v419 = vpop.f32.mrb[0].mxu0
  %420 = vdwg.mxu0
  %v421 = vmax.f32 %v321, %v413
  %v422 = vmax.f32 %v322, %v418
  %v423 = vld [vmem:[%s2] sm:$0xff]
  %v424 = vld [vmem:[%s2 + $0x8] sm:$0xff]
  %426 = vset.pattern.permute.xlu0 0
  %427 = vperm.xlu0 %426, %v423
  %v428 = vpop.permute.xlu0 %427
  %431 = vset.pattern.permute.xlu0 0
  %432 = vperm.xlu0 %431, %v424
  %v433 = vpop.permute.xlu0 %432
  %v435 = vadd.f32 %v421, %v428
  %v436 = vadd.f32 %v422, %v433
  %v437 = vmax.f32 %v435, 0.0
  %v438 = vmax.f32 %v436, 0.0
  %vm439 = vcmask 408576
  %440 = vst.msk [vmem:[%s3] sm:$0xff] %vm439, %v437
  %441 = vst.msk [vmem:[%s3 + $0x8] sm:$0xff] %vm439, %v438
  // Predicated region
  $region14: #{net_forward.4} parent=0 // pred_check
    _
  $region15: #{net_forward.4} parent=0 // pred_check_branch
    %443 = sbr.rel (0) target = $region17
  $region16: #{net_forward.4} parent=0 // pred_region
    _
  $region17: #{net_forward.4} parent=0 // pred_fallthru
    _
  // Predicated region
  $region18: #{net_forward.4} parent=0 // pred_check
    _
  $region19: #{net_forward.4} parent=0 // pred_check_branch
    %445 = sbr.rel (0) target = $region21
  $region20: #{net_forward.4} parent=0 // pred_region
    _
  $region21: #{net_forward.4} parent=0 // pred_fallthru
    _

// kernel: net_forward.5
$region0: #{net_forward.5}
  #allocation0 [shape = 'u32[]', space=smem, size = 0x4, offset = 0x4, fixed_abs, tag = 'smem constant byte address 0x4 - core index']
  #allocation1 [shape = 'u32[144,128]{1,0:T(1,128)}', space=vmem, size = 0x12000, scoped, tag = 'internal scratch']
  %s0 = inlined_call_operand.vmem [shape: f32[2,400], index: 0, kind: input, shape index: {}]
  %s1 = inlined_call_operand.vmem [shape: f32[400,128], index: 1, kind: input, shape index: {}]
  %s2 = inlined_call_operand.vmem [shape: f32[1,128], index: 2, kind: input, shape index: {}]
  %s3 = inlined_call_operand.vmem [shape: f32[128,128], index: 3, kind: input, shape index: {}]
  %s4 = inlined_call_operand.vmem [shape: f32[1,128], index: 4, kind: input, shape index: {}]
  %s5 = inlined_call_operand.vmem [shape: f32[128,10], index: 5, kind: input, shape index: {}]
  %s6 = inlined_call_operand.vmem [shape: f32[1,10], index: 6, kind: input, shape index: {}]
  %s7 = inlined_call_operand.hbm [shape: f32[2,10], index: 7, kind: output, shape index: {}]
  %s8 = sld [smem:[#allocation0]]
  $region38: #{net_forward.5} parent=0
    _
  %s10 = ssub.s32 1, %s8
  %s11 = scalar_select 0, %s10, %s8
  $region1: #{net_forward.5} parent=0
    #allocation2 [shape = 'u8[1024]{0}', space=vmem, size = 0x400, scoped, tag = 'output window, operand 0, single buffered']
    #allocation3 [shape = 's32[1]{0}', space=sflag, size = 0x4, scoped, tag = 'scoped memory for net_forward.5']
    %12 = vsyncpa [#allocation3], 0
    // Predicated region
    $region2: #{net_forward.5} parent=1 // pred_check
      _
    $region3: #{net_forward.5} parent=1 // pred_check_branch
      %14 = sbr.rel (0) target = $region5
    $region4: #{net_forward.5} parent=1 // pred_region
      _
    $region5: #{net_forward.5} parent=1 // pred_fallthru
      _
    // Predicated region
    $region6: #{net_forward.5} parent=1 // pred_check
      _
    $region7: #{net_forward.5} parent=1 // pred_check_branch
      %16 = sbr.rel (0) target = $region9
    $region8: #{net_forward.5} parent=1 // pred_region
      _
    $region9: #{net_forward.5} parent=1 // pred_fallthru
      _
    // Predicated region
    $region10: #{net_forward.5} parent=1 // pred_check
      _
    $region11: #{net_forward.5} parent=1 // pred_check_branch
      %18 = sbr.rel (0) target = $region13
    $region12: #{net_forward.5} parent=1 // pred_region
      _
    $region13: #{net_forward.5} parent=1 // pred_fallthru
      _
    // Predicated region
    $region14: #{net_forward.5} parent=1 // pred_check
      _
    $region15: #{net_forward.5} parent=1 // pred_check_branch
      %20 = sbr.rel (0) target = $region17
    $region16: #{net_forward.5} parent=1 // pred_region
      _
    $region17: #{net_forward.5} parent=1 // pred_fallthru
      _
    // Predicated region
    $region18: #{net_forward.5} parent=1 // pred_check
      _
    $region19: #{net_forward.5} parent=1 // pred_check_branch
      %22 = sbr.rel (0) target = $region21
    $region20: #{net_forward.5} parent=1 // pred_region
      _
    $region21: #{net_forward.5} parent=1 // pred_fallthru
      _
    // Predicated region
    $region22: #{net_forward.5} parent=1 // pred_check
      _
    $region23: #{net_forward.5} parent=1 // pred_check_branch
      %24 = sbr.rel (0) target = $region25
    $region24: #{net_forward.5} parent=1 // pred_region
      _
    $region25: #{net_forward.5} parent=1 // pred_fallthru
      _
    // Predicated region
    $region26: #{net_forward.5} parent=1 // pred_check
      _
    $region27: #{net_forward.5} parent=1 // pred_check_branch
      %26 = sbr.rel (0) target = $region29
    $region28: #{net_forward.5} parent=1 // pred_region
      _
    $region29: #{net_forward.5} parent=1 // pred_fallthru
      _
    %v27 = vld [vmem:[%s0] sm:$0xff]
    %v28 = vld [vmem:[%s1] sm:$0xff]
    %v29 = vld [vmem:[%s1 + $0x8] sm:$0xff]
    %v30 = vld [vmem:[%s1 + $0x10] sm:$0xff]
    %v31 = vld [vmem:[%s1 + $0x18] sm:$0xff]
    %v32 = vld [vmem:[%s1 + $0x20] sm:$0xff]
    %v33 = vld [vmem:[%s1 + $0x28] sm:$0xff]
    %v34 = vld [vmem:[%s1 + $0x30] sm:$0xff]
    %v35 = vld [vmem:[%s1 + $0x38] sm:$0xff]
    %v36 = vld [vmem:[%s1 + $0x40] sm:$0xff]
    %v37 = vld [vmem:[%s1 + $0x48] sm:$0xff]
    %v38 = vld [vmem:[%s1 + $0x50] sm:$0xff]
    %v39 = vld [vmem:[%s1 + $0x58] sm:$0xff]
    %v40 = vld [vmem:[%s1 + $0x60] sm:$0xff]
    %v41 = vld [vmem:[%s1 + $0x68] sm:$0xff]
    %v42 = vld [vmem:[%s1 + $0x70] sm:$0xff]
    %v43 = vld [vmem:[%s1 + $0x78] sm:$0xff]
    %v44 = vld [vmem:[%s1 + $0x80] sm:$0xff]
    %v45 = vld [vmem:[%s1 + $0x88] sm:$0xff]
    %v46 = vld [vmem:[%s1 + $0x90] sm:$0xff]
    %v47 = vld [vmem:[%s1 + $0x98] sm:$0xff]
    %v48 = vld [vmem:[%s1 + $0xa0] sm:$0xff]
    %v49 = vld [vmem:[%s1 + $0xa8] sm:$0xff]
    %v50 = vld [vmem:[%s1 + $0xb0] sm:$0xff]
    %v51 = vld [vmem:[%s1 + $0xb8] sm:$0xff]
    %v52 = vld [vmem:[%s1 + $0xc0] sm:$0xff]
    %v53 = vld [vmem:[%s1 + $0xc8] sm:$0xff]
    %v54 = vld [vmem:[%s1 + $0xd0] sm:$0xff]
    %v55 = vld [vmem:[%s1 + $0xd8] sm:$0xff]
    %v56 = vld [vmem:[%s1 + $0xe0] sm:$0xff]
    %v57 = vld [vmem:[%s1 + $0xe8] sm:$0xff]
    %v58 = vld [vmem:[%s1 + $0xf0] sm:$0xff]
    %v59 = vld [vmem:[%s1 + $0xf8] sm:$0xff]
    %v60 = vld [vmem:[%s1 + $0x100] sm:$0xff]
    %v61 = vld [vmem:[%s1 + $0x108] sm:$0xff]
    %v62 = vld [vmem:[%s1 + $0x110] sm:$0xff]
    %v63 = vld [vmem:[%s1 + $0x118] sm:$0xff]
    %v64 = vld [vmem:[%s1 + $0x120] sm:$0xff]
    %v65 = vld [vmem:[%s1 + $0x128] sm:$0xff]
    %v66 = vld [vmem:[%s1 + $0x130] sm:$0xff]
    %v67 = vld [vmem:[%s1 + $0x138] sm:$0xff]
    %v68 = vld [vmem:[%s1 + $0x140] sm:$0xff]
    %v69 = vld [vmem:[%s1 + $0x148] sm:$0xff]
    %v70 = vld [vmem:[%s1 + $0x150] sm:$0xff]
    %v71 = vld [vmem:[%s1 + $0x158] sm:$0xff]
    %v72 = vld [vmem:[%s1 + $0x160] sm:$0xff]
    %v73 = vld [vmem:[%s1 + $0x168] sm:$0xff]
    %v74 = vld [vmem:[%s1 + $0x170] sm:$0xff]
    %v75 = vld [vmem:[%s1 + $0x178] sm:$0xff]
    %v76 = vld [vmem:[%s1 + $0x180] sm:$0xff]
    %v77 = vld [vmem:[%s1 + $0x188] sm:$0xff]
    %v78 = vld [vmem:[%s2] sm:$0x1]
    %v80 = vlaneseq
    %v81 = vshrl.u32 %v80, 7
    %v82 = vsub.s32 0, %v81
    %v83 = vrot.slane %v78, %v82
    %v86 = vcombine.high %v27, %v27
    %v88 = vunpack.c.l.s4 1983009808
    %v89 = vunpack.c.0.s8 %v88
    %v90 = vlaneseq
    %v91 = vshrl.u32 %v90, 7
    %v92 = vsub.s32 %v89, %v91
    %v93 = vrot.slane %v27, %v92
    %v95 = vunpack.c.l.s4 1983009808
    %v96 = vunpack.c.0.s8 %v95
    %v97 = vlaneseq
    %v98 = vshrl.u32 %v97, 7
    %v99 = vsub.s32 %v96, %v98
    %v100 = vrot.slane %v86, %v99
    %v101 = vcombine.high %v93, %v93
    %v102 = vcombine.high %v100, %v100
    %vm106 = vcmask 130048
    %v107 = vsel %vm106, %v102, 0
    %109 = vmatprep.subr.mxu0 0.0
    %110 = vmatpush1.msra.mxu0 %v28
    %111 = vmatprep.subr.mxu0 0.0
    %112 = vmatpush1.msra.mxu0 %v29
    %113 = vmatprep.subr.mxu0 0.0
    %114 = vmatpush1.msra.mxu0 %v30
    %115 = vmatprep.subr.mxu0 0.0
    %116 = vmatpush1.msra.mxu0 %v31
    %117 = vmatprep.subr.mxu0 0.0
    %118 = vmatpush1.msra.mxu0 %v32
    %119 = vmatprep.subr.mxu0 0.0
    %120 = vmatpush1.msra.mxu0 %v33
    %121 = vmatprep.subr.mxu0 0.0
    %122 = vmatpush1.msra.mxu0 %v34
    %123 = vmatprep.subr.mxu0 0.0
    %124 = vmatpush1.msra.mxu0 %v35
    %125 = vmatprep.subr.mxu0 0.0
    %126 = vmatpush1.msra.mxu0 %v36
    %127 = vmatprep.subr.mxu0 0.0
    %128 = vmatpush1.msra.mxu0 %v37
    %129 = vmatprep.subr.mxu0 0.0
    %130 = vmatpush1.msra.mxu0 %v38
    %131 = vmatprep.subr.mxu0 0.0
    %132 = vmatpush1.msra.mxu0 %v39
    %133 = vmatprep.subr.mxu0 0.0
    %134 = vmatpush1.msra.mxu0 %v40
    %135 = vmatprep.subr.mxu0 0.0
    %136 = vmatpush1.msra.mxu0 %v41
    %137 = vmatprep.subr.mxu0 0.0
    %138 = vmatpush1.msra.mxu0 %v42
    %139 = vmatprep.subr.mxu0 0.0
    %140 = vmatpush1.msra.mxu0 %v43
    %141 = vmatprep.subr.mxu0 0.0
    %142 = vmatpush1.msra.mxu0 %v44
    %143 = vmatprep.subr.mxu0 0.0
    %144 = vmatpush1.msra.mxu0 %v45
    %145 = vmatprep.subr.mxu0 0.0
    %146 = vmatpush1.msra.mxu0 %v46
    %147 = vmatprep.subr.mxu0 0.0
    %148 = vmatpush1.msra.mxu0 %v47
    %149 = vmatprep.subr.mxu0 0.0
    %150 = vmatpush1.msra.mxu0 %v48
    %151 = vmatprep.subr.mxu0 0.0
    %152 = vmatpush1.msra.mxu0 %v49
    %153 = vmatprep.subr.mxu0 0.0
    %154 = vmatpush1.msra.mxu0 %v50
    %155 = vmatprep.subr.mxu0 0.0
    %156 = vmatpush1.msra.mxu0 %v51
    %157 = vmatprep.subr.mxu0 0.0
    %158 = vmatpush1.msra.mxu0 %v52
    %159 = vmatprep.subr.mxu0 0.0
    %160 = vmatpush1.msra.mxu0 %v53
    %161 = vmatprep.subr.mxu0 0.0
    %162 = vmatpush1.msra.mxu0 %v54
    %163 = vmatprep.subr.mxu0 0.0
    %164 = vmatpush1.msra.mxu0 %v55
    %165 = vmatprep.subr.mxu0 0.0
    %166 = vmatpush1.msra.mxu0 %v56
    %167 = vmatprep.subr.mxu0 0.0
    %168 = vmatpush1.msra.mxu0 %v57
    %169 = vmatprep.subr.mxu0 0.0
    %170 = vmatpush1.msra.mxu0 %v58
    %171 = vmatprep.subr.mxu0 0.0
    %172 = vmatpush1.msra.mxu0 %v59
    %173 = vmatprep.mubr.f32.mxu0 %v101
    %174 = vmatmul.mubr.f32.gmra.mrb[0].mxu0 %v93
    %v175 = vpop.f32.mrb[0].mxu0
    %v176 = vadd.f32 %v83, %v175
    %v177 = vpop.f32.mrb[0].mxu0
    %178 = vdwg.mxu0
    %179 = vmatprep.subr.mxu0 0.0
    %180 = vmatpush1.msra.mxu0 %v60
    %181 = vmatprep.subr.mxu0 0.0
    %182 = vmatpush1.msra.mxu0 %v61
    %183 = vmatprep.subr.mxu0 0.0
    %184 = vmatpush1.msra.mxu0 %v62
    %185 = vmatprep.subr.mxu0 0.0
    %186 = vmatpush1.msra.mxu0 %v63
    %187 = vmatprep.subr.mxu0 0.0
    %188 = vmatpush1.msra.mxu0 %v64
    %189 = vmatprep.subr.mxu0 0.0
    %190 = vmatpush1.msra.mxu0 %v65
    %191 = vmatprep.subr.mxu0 0.0
    %192 = vmatpush1.msra.mxu0 %v66
    %193 = vmatprep.subr.mxu0 0.0
    %194 = vmatpush1.msra.mxu0 %v67
    %195 = vmatprep.subr.mxu0 0.0
    %196 = vmatpush1.msra.mxu0 %v68
    %197 = vmatprep.subr.mxu0 0.0
    %198 = vmatpush1.msra.mxu0 %v69
    %199 = vmatprep.subr.mxu0 0.0
    %200 = vmatpush1.msra.mxu0 %v70
    %201 = vmatprep.subr.mxu0 0.0
    %202 = vmatpush1.msra.mxu0 %v71
    %203 = vmatprep.subr.mxu0 0.0
    %204 = vmatpush1.msra.mxu0 %v72
    %205 = vmatprep.subr.mxu0 0.0
    %206 = vmatpush1.msra.mxu0 %v73
    %207 = vmatprep.subr.mxu0 0.0
    %208 = vmatpush1.msra.mxu0 %v74
    %209 = vmatprep.subr.mxu0 0.0
    %210 = vmatpush1.msra.mxu0 %v75
    %211 = vmatprep.subr.mxu0 0.0
    %212 = vmatpush1.msra.mxu0 %v76
    %213 = vmatprep.subr.mxu0 0.0
    %214 = vmatpush1.msra.mxu0 %v77
    %215 = vmatprep.subr.mxu0 0.0
    %216 = vmatpush1.msra.mxu0 0.0
    %217 = vmatprep.subr.mxu0 0.0
    %218 = vmatpush1.msra.mxu0 0.0
    %219 = vmatprep.subr.mxu0 0.0
    %220 = vmatpush1.msra.mxu0 0.0
    %221 = vmatprep.subr.mxu0 0.0
    %222 = vmatpush1.msra.mxu0 0.0
    %223 = vmatprep.subr.mxu0 0.0
    %224 = vmatpush1.msra.mxu0 0.0
    %225 = vmatprep.subr.mxu0 0.0
    %226 = vmatpush1.msra.mxu0 0.0
    %227 = vmatprep.subr.mxu0 0.0
    %228 = vmatpush1.msra.mxu0 0.0
    %229 = vmatprep.subr.mxu0 0.0
    %230 = vmatpush1.msra.mxu0 0.0
    %231 = vmatprep.subr.mxu0 0.0
    %232 = vmatpush1.msra.mxu0 0.0
    %233 = vmatprep.subr.mxu0 0.0
    %234 = vmatpush1.msra.mxu0 0.0
    %235 = vmatprep.subr.mxu0 0.0
    %236 = vmatpush1.msra.mxu0 0.0
    %237 = vmatprep.subr.mxu0 0.0
    %238 = vmatpush1.msra.mxu0 0.0
    %239 = vmatprep.subr.mxu0 0.0
    %240 = vmatpush1.msra.mxu0 0.0
    %241 = vmatprep.subr.mxu0 0.0
    %242 = vmatpush1.msra.mxu0 0.0
    %243 = vmatprep.mubr.f32.mxu0 %v107
    %244 = vmatmul.mubr.f32.gmra.mrb[0].mxu0 %v100
    %v245 = vpop.f32.mrb[0].mxu0
    %v246 = vadd.f32 %v176, %v245
    %v247 = vpop.f32.mrb[0].mxu0
    %248 = vdwg.mxu0
    %v249 = vmax.f32 %v246, 0.0
    %v250 = vld [vmem:[%s3] sm:$0xff]
    %v251 = vld [vmem:[%s3 + $0x8] sm:$0xff]
    %v252 = vld [vmem:[%s3 + $0x10] sm:$0xff]
    %v253 = vld [vmem:[%s3 + $0x18] sm:$0xff]
    %v254 = vld [vmem:[%s3 + $0x20] sm:$0xff]
    %v255 = vld [vmem:[%s3 + $0x28] sm:$0xff]
    %v256 = vld [vmem:[%s3 + $0x30] sm:$0xff]
    %v257 = vld [vmem:[%s3 + $0x38] sm:$0xff]
    %v258 = vld [vmem:[%s3 + $0x40] sm:$0xff]
    %v259 = vld [vmem:[%s3 + $0x48] sm:$0xff]
    %v260 = vld [vmem:[%s3 + $0x50] sm:$0xff]
    %v261 = vld [vmem:[%s3 + $0x58] sm:$0xff]
    %v262 = vld [vmem:[%s3 + $0x60] sm:$0xff]
    %v263 = vld [vmem:[%s3 + $0x68] sm:$0xff]
    %v264 = vld [vmem:[%s3 + $0x70] sm:$0xff]
    %v265 = vld [vmem:[%s3 + $0x78] sm:$0xff]
    %v266 = vld [vmem:[%s4] sm:$0x1]
    %v268 = vlaneseq
    %v269 = vshrl.u32 %v268, 7
    %v270 = vsub.s32 0, %v269
    %v271 = vrot.slane %v266, %v270
    %273 = vmatprep.subr.mxu0 0.0
    %274 = vmatpush1.msra.mxu0 %v250
    %275 = vmatprep.subr.mxu0 0.0
    %276 = vmatpush1.msra.mxu0 %v251
    %277 = vmatprep.subr.mxu0 0.0
    %278 = vmatpush1.msra.mxu0 %v252
    %279 = vmatprep.subr.mxu0 0.0
    %280 = vmatpush1.msra.mxu0 %v253
    %281 = vmatprep.subr.mxu0 0.0
    %282 = vmatpush1.msra.mxu0 %v254
    %283 = vmatprep.subr.mxu0 0.0
    %284 = vmatpush1.msra.mxu0 %v255
    %285 = vmatprep.subr.mxu0 0.0
    %286 = vmatpush1.msra.mxu0 %v256
    %287 = vmatprep.subr.mxu0 0.0
    %288 = vmatpush1.msra.mxu0 %v257
    %289 = vmatprep.subr.mxu0 0.0
    %290 = vmatpush1.msra.mxu0 %v258
    %291 = vmatprep.subr.mxu0 0.0
    %292 = vmatpush1.msra.mxu0 %v259
    %293 = vmatprep.subr.mxu0 0.0
    %294 = vmatpush1.msra.mxu0 %v260
    %295 = vmatprep.subr.mxu0 0.0
    %296 = vmatpush1.msra.mxu0 %v261
    %297 = vmatprep.subr.mxu0 0.0
    %298 = vmatpush1.msra.mxu0 %v262
    %299 = vmatprep.subr.mxu0 0.0
    %300 = vmatpush1.msra.mxu0 %v263
    %301 = vmatprep.subr.mxu0 0.0
    %302 = vmatpush1.msra.mxu0 %v264
    %303 = vmatprep.subr.mxu0 0.0
    %304 = vmatpush1.msra.mxu0 %v265
    %305 = vmatprep.subr.mxu0 0.0
    %306 = vmatpush1.msra.mxu0 0.0
    %307 = vmatprep.subr.mxu0 0.0
    %308 = vmatpush1.msra.mxu0 0.0
    %309 = vmatprep.subr.mxu0 0.0
    %310 = vmatpush1.msra.mxu0 0.0
    %311 = vmatprep.subr.mxu0 0.0
    %312 = vmatpush1.msra.mxu0 0.0
    %313 = vmatprep.subr.mxu0 0.0
    %314 = vmatpush1.msra.mxu0 0.0
    %315 = vmatprep.subr.mxu0 0.0
    %316 = vmatpush1.msra.mxu0 0.0
    %317 = vmatprep.subr.mxu0 0.0
    %318 = vmatpush1.msra.mxu0 0.0
    %319 = vmatprep.subr.mxu0 0.0
    %320 = vmatpush1.msra.mxu0 0.0
    %321 = vmatprep.subr.mxu0 0.0
    %322 = vmatpush1.msra.mxu0 0.0
    %323 = vmatprep.subr.mxu0 0.0
    %324 = vmatpush1.msra.mxu0 0.0
    %325 = vmatprep.subr.mxu0 0.0
    %326 = vmatpush1.msra.mxu0 0.0
    %327 = vmatprep.subr.mxu0 0.0
    %328 = vmatpush1.msra.mxu0 0.0
    %329 = vmatprep.subr.mxu0 0.0
    %330 = vmatpush1.msra.mxu0 0.0
    %331 = vmatprep.subr.mxu0 0.0
    %332 = vmatpush1.msra.mxu0 0.0
    %333 = vmatprep.subr.mxu0 0.0
    %334 = vmatpush1.msra.mxu0 0.0
    %335 = vmatprep.subr.mxu0 0.0
    %336 = vmatpush1.msra.mxu0 0.0
    %337 = vmatprep.mubr.f32.mxu0 0.0
    %338 = vmatmul.mubr.f32.gmra.mrb[0].mxu0 %v249
    %v339 = vpop.f32.mrb[0].mxu0
    %v340 = vadd.f32 %v271, %v339
    %v341 = vpop.f32.mrb[0].mxu0
    %342 = vdwg.mxu0
    %v343 = vmax.f32 %v340, 0.0
    %v344 = vld [vmem:[%s5] sm:$0xff]
    %v345 = vld [vmem:[%s5 + $0x8] sm:$0xff]
    %v346 = vld [vmem:[%s5 + $0x10] sm:$0xff]
    %v347 = vld [vmem:[%s5 + $0x18] sm:$0xff]
    %v348 = vld [vmem:[%s5 + $0x20] sm:$0xff]
    %v349 = vld [vmem:[%s5 + $0x28] sm:$0xff]
    %v350 = vld [vmem:[%s5 + $0x30] sm:$0xff]
    %v351 = vld [vmem:[%s5 + $0x38] sm:$0xff]
    %v352 = vld [vmem:[%s5 + $0x40] sm:$0xff]
    %v353 = vld [vmem:[%s5 + $0x48] sm:$0xff]
    %v354 = vld [vmem:[%s5 + $0x50] sm:$0xff]
    %v355 = vld [vmem:[%s5 + $0x58] sm:$0xff]
    %v356 = vld [vmem:[%s5 + $0x60] sm:$0xff]
    %v357 = vld [vmem:[%s5 + $0x68] sm:$0xff]
    %v358 = vld [vmem:[%s5 + $0x70] sm:$0xff]
    %v359 = vld [vmem:[%s5 + $0x78] sm:$0xff]
    %v360 = vld [vmem:[%s6] sm:$0x1]
    %v362 = vlaneseq
    %v363 = vshrl.u32 %v362, 7
    %v364 = vsub.s32 0, %v363
    %v365 = vrot.slane %v360, %v364
    %367 = vmatprep.subr.mxu0 0.0
    %368 = vmatpush1.msra.mxu0 %v344
    %369 = vmatprep.subr.mxu0 0.0
    %370 = vmatpush1.msra.mxu0 %v345
    %371 = vmatprep.subr.mxu0 0.0
    %372 = vmatpush1.msra.mxu0 %v346
    %373 = vmatprep.subr.mxu0 0.0
    %374 = vmatpush1.msra.mxu0 %v347
    %375 = vmatprep.subr.mxu0 0.0
    %376 = vmatpush1.msra.mxu0 %v348
    %377 = vmatprep.subr.mxu0 0.0
    %378 = vmatpush1.msra.mxu0 %v349
    %379 = vmatprep.subr.mxu0 0.0
    %380 = vmatpush1.msra.mxu0 %v350
    %381 = vmatprep.subr.mxu0 0.0
    %382 = vmatpush1.msra.mxu0 %v351
    %383 = vmatprep.subr.mxu0 0.0
    %384 = vmatpush1.msra.mxu0 %v352
    %385 = vmatprep.subr.mxu0 0.0
    %386 = vmatpush1.msra.mxu0 %v353
    %387 = vmatprep.subr.mxu0 0.0
    %388 = vmatpush1.msra.mxu0 %v354
    %389 = vmatprep.subr.mxu0 0.0
    %390 = vmatpush1.msra.mxu0 %v355
    %391 = vmatprep.subr.mxu0 0.0
    %392 = vmatpush1.msra.mxu0 %v356
    %393 = vmatprep.subr.mxu0 0.0
    %394 = vmatpush1.msra.mxu0 %v357
    %395 = vmatprep.subr.mxu0 0.0
    %396 = vmatpush1.msra.mxu0 %v358
    %397 = vmatprep.subr.mxu0 0.0
    %398 = vmatpush1.msra.mxu0 %v359
    %399 = vmatprep.subr.mxu0 0.0
    %400 = vmatpush1.msra.mxu0 0.0
    %401 = vmatprep.subr.mxu0 0.0
    %402 = vmatpush1.msra.mxu0 0.0
    %403 = vmatprep.subr.mxu0 0.0
    %404 = vmatpush1.msra.mxu0 0.0
    %405 = vmatprep.subr.mxu0 0.0
    %406 = vmatpush1.msra.mxu0 0.0
    %407 = vmatprep.subr.mxu0 0.0
    %408 = vmatpush1.msra.mxu0 0.0
    %409 = vmatprep.subr.mxu0 0.0
    %410 = vmatpush1.msra.mxu0 0.0
    %411 = vmatprep.subr.mxu0 0.0
    %412 = vmatpush1.msra.mxu0 0.0
    %413 = vmatprep.subr.mxu0 0.0
    %414 = vmatpush1.msra.mxu0 0.0
    %415 = vmatprep.subr.mxu0 0.0
    %416 = vmatpush1.msra.mxu0 0.0
    %417 = vmatprep.subr.mxu0 0.0
    %418 = vmatpush1.msra.mxu0 0.0
    %419 = vmatprep.subr.mxu0 0.0
    %420 = vmatpush1.msra.mxu0 0.0
    %421 = vmatprep.subr.mxu0 0.0
    %422 = vmatpush1.msra.mxu0 0.0
    %423 = vmatprep.subr.mxu0 0.0
    %424 = vmatpush1.msra.mxu0 0.0
    %425 = vmatprep.subr.mxu0 0.0
    %426 = vmatpush1.msra.mxu0 0.0
    %427 = vmatprep.subr.mxu0 0.0
    %428 = vmatpush1.msra.mxu0 0.0
    %429 = vmatprep.subr.mxu0 0.0
    %430 = vmatpush1.msra.mxu0 0.0
    %431 = vmatprep.mubr.f32.mxu0 0.0
    %432 = vmatmul.mubr.f32.gmra.mrb[0].mxu0 %v343
    %v433 = vpop.f32.mrb[0].mxu0
    %v434 = vadd.f32 %v365, %v433
    %v435 = vpop.f32.mrb[0].mxu0
    %436 = vdwg.mxu0
    %vm437 = vcmask 74752
    %438 = vst.msk [vmem:[#allocation2] sm:$0x3] %vm437, %v434
    // Predicated region
    $region30: #{net_forward.5} parent=1 // pred_check
      _
    $region31: #{net_forward.5} parent=1 // pred_check_branch
      %440 = sbr.rel (0) target = $region33
    $region32: #{net_forward.5} parent=1 // pred_region
      %s442 = ssub.s32 32, 32
      %443 = vsyncadd [#allocation3], %s442
      %s445 = sshll.u32 [#allocation2], 4
      %s446 = int_to_ptr.vmem [resolvable:$true] %s445
      %448 = dma.vmem_to_hbm [thread:$0]  %s446, 32, %s7, [#allocation3]
    $region33: #{net_forward.5} parent=1 // pred_fallthru
      _
    // Predicated region
    $region34: #{net_forward.5} parent=1 // pred_check
      _
    $region35: #{net_forward.5} parent=1 // pred_check_branch
      %450 = sbr.rel (0) target = $region37
    $region36: #{net_forward.5} parent=1 // pred_region
      %451 = dma.done [#allocation3], 32
    $region37: #{net_forward.5} parent=1 // pred_fallthru
      _
    %452 = vsyncpa [#allocation3], 1

</llo_original>
